<compile_context>
chip_gen: v5e
topology: v5e:2x2
jax: 0.10.0
libtpu: 0.0.40
codegen_flags: <defaults>
</compile_context>

<pallas_src>
import numpy as np
import jax
import jax.numpy as jnp
from jax import lax
from jax.experimental import pallas as pl
from jax.experimental.pallas import tpu as pltpu


# ----------------------------------------------------------------------------
# Host-side parameter transforms
# ----------------------------------------------------------------------------
def fold_bn(wt, b, gamma, beta, mean, var, eps=1e-5):
    """Fold an eval-mode BatchNorm2d that follows a conv into the conv."""
    sc = gamma / jnp.sqrt(var + eps)
    w2 = wt * sc[:, None, None, None]
    b0 = jnp.zeros((wt.shape[0],), jnp.float32) if b is None else b
    b2 = (b0 - mean) * sc + beta
    return w2, b2


def stack_conv9(wt):
    """(Cout, Cin, 3, 3) -> (Cout, 9*Cin) bf16, contraction index ordered
    (dh, dw, cin) so it matches an im2col operand whose rows are k = dh*3+dw
    blocks of Cin."""
    co, ci = wt.shape[:2]
    return jnp.transpose(wt, (0, 2, 3, 1)).reshape(co, 9 * ci).astype(jnp.bfloat16)


# ----------------------------------------------------------------------------
# Fused CAT_HTIHT forward: one Pallas kernel, one batch element per grid step
# ----------------------------------------------------------------------------
def cat_htiht_forward(x, p, vote2d, r, c, h, w_sp):
    B, C, _, _ = x.shape
    RC, HW = r * c, h * w_sp
    norm = float(max(r, c))
    eps = 1e-5

    # ---- parameter prep (folds, layout, dtypes) ----
    bn_sc = p['bn_g'] / jnp.sqrt(p['bn_v'] + eps)
    bn_sh = p['bn_b'] - p['bn_m'] * bn_sc

    vote = (vote2d * (1.0 / norm)).astype(jnp.bfloat16)   # HT table, 1/norm folded
    votet = vote2d.T.astype(jnp.bfloat16)                 # IHT table

    w1, b1 = fold_bn(p['w_c1'], p['b_c1'], p['g1'], p['be1'], p['m1'], p['v1'])
    w2, b2 = fold_bn(p['w_c2'], p['b_c2'], p['g2'], p['be2'], p['m2'], p['v2'])
    w1s, w2s = stack_conv9(w1), stack_conv9(w2)
    wcc1s, wcc2s = stack_conv9(p['w_cc1']), stack_conv9(p['w_cc2'])

    # All per-channel scalars packed into one (C, 16) f32 array (one tile, one
    # DMA): cols 0..8 = depthwise taps, 9 = dw bias, 10/11 = BN scale/shift,
    # 12/13 = conv1/conv2 folded biases.
    pcp = jnp.zeros((C, 16), jnp.float32)
    pcp = pcp.at[:, 0:9].set(p['w_dw'].astype(jnp.float32))
    pcp = pcp.at[:, 9].set(p['b_dw'])
    pcp = pcp.at[:, 10].set(bn_sc)
    pcp = pcp.at[:, 11].set(bn_sh)
    pcp = pcp.at[:, 12].set(b1)
    pcp = pcp.at[:, 13].set(b2)

    x2d = x.reshape(B, C, RC).astype(jnp.float32)

    # flat zero-padded scratch geometry
    L_dw = (h + 8) * w_sp          # depthwise: 4 pad rows top/bottom
    L_hw = (h + 2) * w_sp + 2      # 3x3 on (h,w): 1 pad row each side + guards
    L_rc = (r + 2) * c + 2         # 3x3 on (r,c)
    base_dw = 4 * w_sp
    base_hw = w_sp + 1
    base_rc = c + 1

    def conv3x3(pad_ref, im_ref, w_ref, bias, hh, ww, mask_l, mask_r, relu):
        """3x3 conv, stride 1, pad 1, as ONE MXU dot: the 9 shifted/masked taps
        are written into the im2col scratch (rows k*Cin:(k+1)*Cin) and the whole
        (9*Cin, hh*ww) operand is contracted against the stacked (Cout, 9*Cin)
        bf16 weight in a single matmul."""
        cin = pad_ref.shape[0]
        hw = hh * ww
        pv = pad_ref[...]
        for dh in range(3):
            for dwk in range(3):
                k = dh * 3 + dwk
                xs = pv[:, dh * ww + dwk: dh * ww + dwk + hw]
                if dwk == 0:       # source col j-1: invalid at j == 0
                    xs = jnp.where(mask_l, xs, 0.0)
                elif dwk == 2:     # source col j+1: invalid at j == ww-1
                    xs = jnp.where(mask_r, xs, 0.0)
                im_ref[k * cin:(k + 1) * cin, 0:hw] = xs
        acc = jnp.dot(w_ref[...],
                      im_ref[0:9 * cin, 0:hw].astype(jnp.bfloat16),
                      preferred_element_type=jnp.float32)          # (Cout, hw)
        if bias is not None:
            acc = acc + bias
        return jnp.maximum(acc, 0.0) if relu else acc

    def kernel(x_ref, vote_ref, votet_ref, pcp_ref,
               w1_ref, w2_ref, wcc1_ref, wcc2_ref, o_ref,
               pad_dw, pad_c1, pad_c2, pad_cat, pad_cc, im_a, im_b):
        # Zero only the pad slices (interiors are fully overwritten each step).
        pad_dw[:, 0:base_dw] = jnp.zeros((C, base_dw), jnp.float32)
        pad_dw[:, base_dw + HW:L_dw] = jnp.zeros((C, base_dw), jnp.float32)
        pad_c1[:, 0:base_hw] = jnp.zeros((C, base_hw), jnp.float32)
        pad_c1[:, base_hw + HW:L_hw] = jnp.zeros((C, base_hw), jnp.float32)
        pad_c2[:, 0:base_hw] = jnp.zeros((C, base_hw), jnp.float32)
        pad_c2[:, base_hw + HW:L_hw] = jnp.zeros((C, base_hw), jnp.float32)
        pad_cat[:, 0:base_rc] = jnp.zeros((2 * C, base_rc), jnp.float32)
        pad_cat[:, base_rc + RC:L_rc] = jnp.zeros((2 * C, base_rc), jnp.float32)
        pad_cc[:, 0:base_rc] = jnp.zeros((4 * C, base_rc), jnp.float32)
        pad_cc[:, base_rc + RC:L_rc] = jnp.zeros((4 * C, base_rc), jnp.float32)

        pcv = pcp_ref[...]                                         # (C, 16)

        # column masks for +-1 W shifts, computed once and shared by all convs
        col_hw = lax.broadcasted_iota(jnp.int32, (1, HW), 1) % w_sp
        m_hw_l, m_hw_r = col_hw != 0, col_hw != (w_sp - 1)
        col_rc = lax.broadcasted_iota(jnp.int32, (1, RC), 1) % c
        m_rc_l, m_rc_r = col_rc != 0, col_rc != (c - 1)

        # self.bn (eval) + self.relu, fused as HT prologue
        xh = jnp.maximum(x_ref[0] * pcv[:, 10:11] + pcv[:, 11:12], 0.0)  # (C, RC)
        # stash xh into its conv_cat slot right away (bounds its live range)
        pad_cat[0:C, base_rc:base_rc + RC] = xh

        # HT: xh @ (vote / norm)   (xh already >= 0, extra ReLU dropped)
        ht = jnp.dot(xh.astype(jnp.bfloat16), vote_ref[...],
                     preferred_element_type=jnp.float32)                 # (C, HW)

        # conv1: depthwise (9,1) conv, padding (4,0), bias, ReLU  (VPU MACs)
        pad_dw[:, base_dw:base_dw + HW] = ht
        pdw = pad_dw[...]
        acc = jnp.zeros((C, HW), jnp.float32)
        for t in range(9):
            acc = acc + pcv[:, t:t + 1] * pdw[:, t * w_sp: t * w_sp + HW]
        dwo = jnp.maximum(acc + pcv[:, 9:10], 0.0)

        # convs: (3x3 conv [BN folded] + ReLU) x 2 — one MXU dot each
        pad_c1[:, base_hw:base_hw + HW] = dwo
        c1 = conv3x3(pad_c1, im_a, w1_ref, pcv[:, 12:13], h, w_sp,
                     m_hw_l, m_hw_r, True)
        pad_c2[:, base_hw:base_hw + HW] = c1
        c2 = conv3x3(pad_c2, im_a, w2_ref, pcv[:, 13:14], h, w_sp,
                     m_hw_l, m_hw_r, True)

        # IHT: c2 @ vote.T   (c2 already >= 0)
        y = jnp.dot(c2.astype(jnp.bfloat16), votet_ref[...],
                    preferred_element_type=jnp.float32)                  # (C, RC)

        # conv_cat(cat([xh, y], dim=1)): xh already sits in rows [0:C]
        pad_cat[C:2 * C, base_rc:base_rc + RC] = y
        o1 = conv3x3(pad_cat, im_b, wcc1_ref, None, r, c, m_rc_l, m_rc_r, True)
        pad_cc[:, base_rc:base_rc + RC] = o1
        o2 = conv3x3(pad_cc, im_b, wcc2_ref, None, r, c, m_rc_l, m_rc_r, False)

        o_ref[0] = o2.astype(o_ref.dtype)

    def wspec(a):
        return pl.BlockSpec(a.shape, lambda b: (0, 0))

    out = pl.pallas_call(
        kernel,
        out_shape=jax.ShapeDtypeStruct((B, C, RC), jnp.float32),
        grid=(B,),
        in_specs=[
            pl.BlockSpec((1, C, RC), lambda b: (b, 0, 0)),
            wspec(vote), wspec(votet), wspec(pcp),
            wspec(w1s), wspec(w2s), wspec(wcc1s), wspec(wcc2s),
        ],
        out_specs=pl.BlockSpec((1, C, RC), lambda b: (b, 0, 0)),
        scratch_shapes=[
            pltpu.VMEM((C, L_dw), jnp.float32),         # depthwise padded input
            pltpu.VMEM((C, L_hw), jnp.float32),         # conv1 padded input
            pltpu.VMEM((C, L_hw), jnp.float32),         # conv2 padded input
            pltpu.VMEM((2 * C, L_rc), jnp.float32),     # conv_cat1 padded input
            pltpu.VMEM((4 * C, L_rc), jnp.float32),     # conv_cat2 padded input
            pltpu.VMEM((9 * C, HW), jnp.float32),       # im2col for (h,w) convs
            pltpu.VMEM((9 * 4 * C, RC), jnp.float32),   # im2col for (r,c) convs
        ],
        compiler_params=pltpu.CompilerParams(
            dimension_semantics=("parallel",),
            vmem_limit_bytes=32 * 1024 * 1024),
    )(x2d, vote, votet, pcp, w1s, w2s, wcc1s, wcc2s)

    return out.reshape(B, C, r, c)


# ----------------------------------------------------------------------------
# Pure-JAX f32 reference (lax convs, unfolded BN) for correctness cross-check
# ----------------------------------------------------------------------------
def ref_forward(x, p, vote2d, r, c, h, w_sp):
    eps = 1e-5
    relu = lambda t: jnp.maximum(t, 0.0)

    def bn(t, g, b, m, v):
        return ((t - m[None, :, None, None]) / jnp.sqrt(v[None, :, None, None] + eps)
                * g[None, :, None, None] + b[None, :, None, None])

    def conv(t, wt, b, pad, groups=1):
        o = jax.lax.conv_general_dilated(
            t, wt, (1, 1), ((pad[0], pad[0]), (pad[1], pad[1])),
            dimension_numbers=('NCHW', 'OIHW', 'NCHW'),
            feature_group_count=groups,
            precision=jax.lax.Precision.HIGHEST)
        return o if b is None else o + b[None, :, None, None]

    B, C = x.shape[:2]
    xh = relu(bn(x, p['bn_g'], p['bn_b'], p['bn_m'], p['bn_v']))
    ht = jnp.dot(relu(xh).reshape(B * C, r * c), vote2d,
                 precision=jax.lax.Precision.HIGHEST) / max(r, c)
    ht = ht.reshape(B, C, h, w_sp)
    out = relu(conv(ht, p['w_dw'][:, None, :, None], p['b_dw'], (4, 0), groups=C))
    out = relu(bn(conv(out, p['w_c1'], p['b_c1'], (1, 1)),
                  p['g1'], p['be1'], p['m1'], p['v1']))
    out = relu(bn(conv(out, p['w_c2'], p['b_c2'], (1, 1)),
                  p['g2'], p['be2'], p['m2'], p['v2']))
    y = jnp.dot(relu(out).reshape(B * C, h * w_sp), vote2d.T,
                precision=jax.lax.Precision.HIGHEST).reshape(B, C, r, c)
    cat = jnp.concatenate([xh, y], axis=1)
    o = relu(conv(cat, p['w_cc1'], None, (1, 1)))
    o = conv(o, p['w_cc2'], None, (1, 1))
    return o


# ----------------------------------------------------------------------------
# Deterministic parameter construction
# ----------------------------------------------------------------------------
def gauss_second_derivative(sigma, filtersize=4):
    # TODO(synk): scipy.ndimage.gaussian_filter(order=2) uses a discrete kernel;
    # here the analytic 2nd derivative of a Gaussian is used (deterministic sigmas).
    xv = np.arange(-filtersize, filtersize + 1, dtype=np.float64)
    g = np.exp(-xv ** 2 / (2.0 * sigma ** 2))
    y = (xv ** 2 / sigma ** 4 - 1.0 / sigma ** 2) * g
    y = -y / np.sum(np.abs(y))
    return y.astype(np.float32)


def init_params(key, C):
    ks = jax.random.split(key, 20)
    nrm = lambda k, shape, s=0.1: s * jax.random.normal(k, shape, jnp.float32)

    # depthwise (9,1) conv taps (groups = C), deterministic sigmas
    sigmas = 1.0 + 1.5 * np.arange(C) / max(C - 1, 1)
    w_dw = np.stack([gauss_second_derivative(s) for s in sigmas])   # (C, 9)

    p = {
        # CAT_HTIHT.bn (eval mode)
        'bn_g': 1.0 + nrm(ks[0], (C,)), 'bn_b': nrm(ks[1], (C,)),
        'bn_m': nrm(ks[2], (C,)), 'bn_v': 1.0 + 0.1 * jax.random.uniform(ks[3], (C,)),
        # htiht.conv1 (depthwise) taps + bias
        'w_dw': jnp.asarray(w_dw), 'b_dw': nrm(ks[4], (C,)),
        # htiht.convs : conv1 + BN1, conv2 + BN2
        'w_c1': nrm(ks[5], (C, C, 3, 3)), 'b_c1': nrm(ks[6], (C,)),
        'g1': 1.0 + nrm(ks[7], (C,)), 'be1': nrm(ks[8], (C,)),
        'm1': nrm(ks[9], (C,)), 'v1': 1.0 + 0.1 * jax.random.uniform(ks[10], (C,)),
        'w_c2': nrm(ks[11], (C, C, 3, 3)), 'b_c2': nrm(ks[12], (C,)),
        'g2': 1.0 + nrm(ks[13], (C,)), 'be2': nrm(ks[14], (C,)),
        'm2': nrm(ks[15], (C,)), 'v2': 1.0 + 0.1 * jax.random.uniform(ks[16], (C,)),
        # conv_cat (no bias): (2C -> 4C) then (4C -> C)
        'w_cc1': nrm(ks[17], (4 * C, 2 * C, 3, 3)),
        'w_cc2': nrm(ks[18], (C, 4 * C, 3, 3)),
    }
    return p


# ----------------------------------------------------------------------------
if __name__ == "__main__":
    B, C = 2, 4                 # inplanes == outplanes == C (required by the module)
    r, c, h, w_sp = 16, 16, 12, 16

    key = jax.random.PRNGKey(0)
    k_vote, k_x, k_p = jax.random.split(key, 3)

    vote_index = (jax.random.uniform(k_vote, (r, c, h, w_sp)) < 0.1).astype(jnp.float32)
    vote2d = vote_index.reshape(r * c, h * w_sp)
    x = jax.random.normal(k_x, (B, C, r, c), jnp.float32)
    params = init_params(k_p, C)

    fwd = jax.jit(cat_htiht_forward, static_argnums=(3, 4, 5, 6))
    out = jax.block_until_ready(fwd(x, params, vote2d, r, c, h, w_sp))
    assert out.shape == (B, C, r, c), out.shape

    ref = jax.block_until_ready(ref_forward(x, params, vote2d, r, c, h, w_sp))
    # Kernel uses bf16 MXU operands (f32 accumulation) across a ~6-stage chain,
    # the reference is full f32 / HIGHEST -> compare at bf16-level tolerance.
    np.testing.assert_allclose(np.asarray(out), np.asarray(ref), rtol=5e-2, atol=1e-1)

    print("KERNEL_OK")
</pallas_src>

<mosaic_0001>
module attributes {stable_mosaic.version = 11 : i64} {
  func.func @kernel(%arg0: i32, %arg1: memref<1x4x256xf32, #tpu.memory_space<vmem>>, %arg2: memref<256x192xbf16, #tpu.memory_space<vmem>>, %arg3: memref<192x256xbf16, #tpu.memory_space<vmem>>, %arg4: memref<4x16xf32, #tpu.memory_space<vmem>>, %arg5: memref<4x36xbf16, #tpu.memory_space<vmem>>, %arg6: memref<4x36xbf16, #tpu.memory_space<vmem>>, %arg7: memref<16x72xbf16, #tpu.memory_space<vmem>>, %arg8: memref<4x144xbf16, #tpu.memory_space<vmem>>, %arg9: memref<1x4x256xf32, #tpu.memory_space<vmem>>, %arg10: memref<4x320xf32, #tpu.memory_space<vmem>>, %arg11: memref<4x226xf32, #tpu.memory_space<vmem>>, %arg12: memref<4x226xf32, #tpu.memory_space<vmem>>, %arg13: memref<8x290xf32, #tpu.memory_space<vmem>>, %arg14: memref<16x290xf32, #tpu.memory_space<vmem>>, %arg15: memref<36x192xf32, #tpu.memory_space<vmem>>, %arg16: memref<144x256xf32, #tpu.memory_space<vmem>>) attributes {dimension_semantics = [#tpu.dimension_semantics<parallel>], iteration_bounds = array<i64: 2>, scalar_prefetch = 0 : i64, scratch_operands = 7 : i64, tpu.core_type = #tpu.core_type<tc>, window_params = [{transform_indices = @transform_0, window_bounds = array<i64: 1, 4, 256>}, {pipeline_mode = #tpu.pipeline_mode<synchronous>, transform_indices = @transform_1, window_bounds = array<i64: 256, 192>}, {pipeline_mode = #tpu.pipeline_mode<synchronous>, transform_indices = @transform_2, window_bounds = array<i64: 192, 256>}, {pipeline_mode = #tpu.pipeline_mode<synchronous>, transform_indices = @transform_3, window_bounds = array<i64: 4, 16>}, {pipeline_mode = #tpu.pipeline_mode<synchronous>, transform_indices = @transform_4, window_bounds = array<i64: 4, 36>}, {pipeline_mode = #tpu.pipeline_mode<synchronous>, transform_indices = @transform_5, window_bounds = array<i64: 4, 36>}, {pipeline_mode = #tpu.pipeline_mode<synchronous>, transform_indices = @transform_6, window_bounds = array<i64: 16, 72>}, {pipeline_mode = #tpu.pipeline_mode<synchronous>, transform_indices = @transform_7, window_bounds = array<i64: 4, 144>}, {transform_indices = @transform_8, window_bounds = array<i64: 1, 4, 256>}]} {
    %cst = arith.constant 0.000000e+00 : f32
    %0 = vector.broadcast %cst : f32 to vector<4x64xf32>
    %c0 = arith.constant 0 : index
    %c0_0 = arith.constant 0 : index
    %1 = vector.load %arg10[%c0, %c0_0] : memref<4x320xf32, #tpu.memory_space<vmem>>, vector<4x64xf32>
    tpu.vector_store %arg10[%c0, %c0_0], %0 {strides = array<i32>} : memref<4x320xf32, #tpu.memory_space<vmem>>, vector<4x64xf32>,
    %cst_1 = arith.constant 0.000000e+00 : f32
    %2 = vector.broadcast %cst_1 : f32 to vector<4x64xf32>
    %c0_2 = arith.constant 0 : index
    %c256 = arith.constant 256 : index
    %3 = vector.load %arg10[%c0_2, %c256] : memref<4x320xf32, #tpu.memory_space<vmem>>, vector<4x64xf32>
    tpu.vector_store %arg10[%c0_2, %c256], %2 {strides = array<i32>} : memref<4x320xf32, #tpu.memory_space<vmem>>, vector<4x64xf32>,
    %cst_3 = arith.constant 0.000000e+00 : f32
    %4 = vector.broadcast %cst_3 : f32 to vector<4x17xf32>
    %c0_4 = arith.constant 0 : index
    %c0_5 = arith.constant 0 : index
    %5 = vector.load %arg11[%c0_4, %c0_5] : memref<4x226xf32, #tpu.memory_space<vmem>>, vector<4x17xf32>
    tpu.vector_store %arg11[%c0_4, %c0_5], %4 {strides = array<i32>} : memref<4x226xf32, #tpu.memory_space<vmem>>, vector<4x17xf32>,
    %cst_6 = arith.constant 0.000000e+00 : f32
    %6 = vector.broadcast %cst_6 : f32 to vector<4x17xf32>
    %c0_7 = arith.constant 0 : index
    %c209 = arith.constant 209 : index
    %7 = vector.load %arg11[%c0_7, %c209] : memref<4x226xf32, #tpu.memory_space<vmem>>, vector<4x17xf32>
    tpu.vector_store %arg11[%c0_7, %c209], %6 {strides = array<i32>} : memref<4x226xf32, #tpu.memory_space<vmem>>, vector<4x17xf32>,
    %cst_8 = arith.constant 0.000000e+00 : f32
    %8 = vector.broadcast %cst_8 : f32 to vector<4x17xf32>
    %c0_9 = arith.constant 0 : index
    %c0_10 = arith.constant 0 : index
    %9 = vector.load %arg12[%c0_9, %c0_10] : memref<4x226xf32, #tpu.memory_space<vmem>>, vector<4x17xf32>
    tpu.vector_store %arg12[%c0_9, %c0_10], %8 {strides = array<i32>} : memref<4x226xf32, #tpu.memory_space<vmem>>, vector<4x17xf32>,
    %cst_11 = arith.constant 0.000000e+00 : f32
    %10 = vector.broadcast %cst_11 : f32 to vector<4x17xf32>
    %c0_12 = arith.constant 0 : index
    %c209_13 = arith.constant 209 : index
    %11 = vector.load %arg12[%c0_12, %c209_13] : memref<4x226xf32, #tpu.memory_space<vmem>>, vector<4x17xf32>
    tpu.vector_store %arg12[%c0_12, %c209_13], %10 {strides = array<i32>} : memref<4x226xf32, #tpu.memory_space<vmem>>, vector<4x17xf32>,
    %cst_14 = arith.constant 0.000000e+00 : f32
    %12 = vector.broadcast %cst_14 : f32 to vector<8x17xf32>
    %c0_15 = arith.constant 0 : index
    %c0_16 = arith.constant 0 : index
    %13 = vector.load %arg13[%c0_15, %c0_16] : memref<8x290xf32, #tpu.memory_space<vmem>>, vector<8x17xf32>
    tpu.vector_store %arg13[%c0_15, %c0_16], %12 {strides = array<i32>} : memref<8x290xf32, #tpu.memory_space<vmem>>, vector<8x17xf32>,
    %cst_17 = arith.constant 0.000000e+00 : f32
    %14 = vector.broadcast %cst_17 : f32 to vector<8x17xf32>
    %c0_18 = arith.constant 0 : index
    %c273 = arith.constant 273 : index
    %15 = vector.load %arg13[%c0_18, %c273] : memref<8x290xf32, #tpu.memory_space<vmem>>, vector<8x17xf32>
    tpu.vector_store %arg13[%c0_18, %c273], %14 {strides = array<i32>} : memref<8x290xf32, #tpu.memory_space<vmem>>, vector<8x17xf32>,
    %cst_19 = arith.constant 0.000000e+00 : f32
    %16 = vector.broadcast %cst_19 : f32 to vector<16x17xf32>
    %c0_20 = arith.constant 0 : index
    %c0_21 = arith.constant 0 : index
    %17 = vector.load %arg14[%c0_20, %c0_21] : memref<16x290xf32, #tpu.memory_space<vmem>>, vector<16x17xf32>
    tpu.vector_store %arg14[%c0_20, %c0_21], %16 {strides = array<i32>} : memref<16x290xf32, #tpu.memory_space<vmem>>, vector<16x17xf32>,
    %cst_22 = arith.constant 0.000000e+00 : f32
    %18 = vector.broadcast %cst_22 : f32 to vector<16x17xf32>
    %c0_23 = arith.constant 0 : index
    %c273_24 = arith.constant 273 : index
    %19 = vector.load %arg14[%c0_23, %c273_24] : memref<16x290xf32, #tpu.memory_space<vmem>>, vector<16x17xf32>
    tpu.vector_store %arg14[%c0_23, %c273_24], %18 {strides = array<i32>} : memref<16x290xf32, #tpu.memory_space<vmem>>, vector<16x17xf32>,
    %c0_25 = arith.constant 0 : index
    %c0_26 = arith.constant 0 : index
    %20 = vector.load %arg4[%c0_25, %c0_26] : memref<4x16xf32, #tpu.memory_space<vmem>>, vector<4x16xf32>
    %21 = tpu.iota {dimensions = array<i32: 1>} : vector<1x192xi32>
    %c16_i32 = arith.constant 16 : i32
    %c0_i32 = arith.constant 0 : i32
    %22 = arith.cmpi eq, %c16_i32, %c0_i32 : i32
    %c1_i32 = arith.constant 1 : i32
    %23 = arith.select %22, %c1_i32, %c16_i32 : i32
    %24 = vector.broadcast %23 : i32 to vector<1x192xi32>
    %25 = arith.remsi %21, %24 : vector<1x192xi32>
    %c0_i32_27 = arith.constant 0 : i32
    %26 = vector.broadcast %c0_i32_27 : i32 to vector<1x192xi32>
    %27 = arith.cmpi ne, %25, %26 : vector<1x192xi32>
    %c0_i32_28 = arith.constant 0 : i32
    %28 = vector.broadcast %c0_i32_28 : i32 to vector<1x192xi32>
    %29 = arith.cmpi slt, %25, %28 : vector<1x192xi32>
    %c0_i32_29 = arith.constant 0 : i32
    %30 = arith.cmpi slt, %23, %c0_i32_29 : i32
    %31 = vector.broadcast %30 : i1 to vector<1x192xi1>
    %32 = vector.broadcast %31 : vector<1x192xi1> to vector<1x192xi1>
    %33 = arith.xori %29, %32 : vector<1x192xi1>
    %34 = arith.andi %33, %27 : vector<1x192xi1>
    %35 = vector.broadcast %23 : i32 to vector<1x192xi32>
    %36 = arith.addi %25, %35 : vector<1x192xi32>
    %37 = arith.select %34, %36, %25 : vector<1x192xi1>, vector<1x192xi32>
    %c0_i32_30 = arith.constant 0 : i32
    %38 = vector.broadcast %c0_i32_30 : i32 to vector<1x192xi32>
    %39 = arith.cmpi ne, %37, %38 : vector<1x192xi32>
    %c15_i32 = arith.constant 15 : i32
    %40 = vector.broadcast %c15_i32 : i32 to vector<1x192xi32>
    %41 = arith.cmpi ne, %37, %40 : vector<1x192xi32>
    %42 = tpu.iota {dimensions = array<i32: 1>} : vector<1x256xi32>
    %c16_i32_31 = arith.constant 16 : i32
    %c0_i32_32 = arith.constant 0 : i32
    %43 = arith.cmpi eq, %c16_i32_31, %c0_i32_32 : i32
    %c1_i32_33 = arith.constant 1 : i32
    %44 = arith.select %43, %c1_i32_33, %c16_i32_31 : i32
    %45 = vector.broadcast %44 : i32 to vector<1x256xi32>
    %46 = arith.remsi %42, %45 : vector<1x256xi32>
    %c0_i32_34 = arith.constant 0 : i32
    %47 = vector.broadcast %c0_i32_34 : i32 to vector<1x256xi32>
    %48 = arith.cmpi ne, %46, %47 : vector<1x256xi32>
    %c0_i32_35 = arith.constant 0 : i32
    %49 = vector.broadcast %c0_i32_35 : i32 to vector<1x256xi32>
    %50 = arith.cmpi slt, %46, %49 : vector<1x256xi32>
    %c0_i32_36 = arith.constant 0 : i32
    %51 = arith.cmpi slt, %44, %c0_i32_36 : i32
    %52 = vector.broadcast %51 : i1 to vector<1x256xi1>
    %53 = vector.broadcast %52 : vector<1x256xi1> to vector<1x256xi1>
    %54 = arith.xori %50, %53 : vector<1x256xi1>
    %55 = arith.andi %54, %48 : vector<1x256xi1>
    %56 = vector.broadcast %44 : i32 to vector<1x256xi32>
    %57 = arith.addi %46, %56 : vector<1x256xi32>
    %58 = arith.select %55, %57, %46 : vector<1x256xi1>, vector<1x256xi32>
    %c0_i32_37 = arith.constant 0 : i32
    %59 = vector.broadcast %c0_i32_37 : i32 to vector<1x256xi32>
    %60 = arith.cmpi ne, %58, %59 : vector<1x256xi32>
    %c15_i32_38 = arith.constant 15 : i32
    %61 = vector.broadcast %c15_i32_38 : i32 to vector<1x256xi32>
    %62 = arith.cmpi ne, %58, %61 : vector<1x256xi32>
    %c0_39 = arith.constant 0 : index
    %c0_40 = arith.constant 0 : index
    %c0_41 = arith.constant 0 : index
    %63 = vector.load %arg1[%c0_39, %c0_40, %c0_41] : memref<1x4x256xf32, #tpu.memory_space<vmem>>, vector<1x4x256xf32>
    %64 = vector.shape_cast %63 : vector<1x4x256xf32> to vector<4x256xf32>
    %65 = vector.extract_strided_slice %20 {offsets = [0, 10], sizes = [4, 1], strides = [1, 1]} : vector<4x16xf32> to vector<4x1xf32>
    %66 = vector.broadcast %65 : vector<4x1xf32> to vector<4x256xf32>
    %67 = arith.mulf %64, %66 : vector<4x256xf32>
    %68 = vector.extract_strided_slice %20 {offsets = [0, 11], sizes = [4, 1], strides = [1, 1]} : vector<4x16xf32> to vector<4x1xf32>
    %69 = vector.broadcast %68 : vector<4x1xf32> to vector<4x256xf32>
    %70 = arith.addf %67, %69 : vector<4x256xf32>
    %cst_42 = arith.constant 0.000000e+00 : f32
    %71 = vector.broadcast %cst_42 : f32 to vector<4x256xf32>
    %72 = arith.maximumf %70, %71 : vector<4x256xf32>
    %c0_43 = arith.constant 0 : index
    %c17 = arith.constant 17 : index
    %73 = vector.load %arg13[%c0_43, %c17] : memref<8x290xf32, #tpu.memory_space<vmem>>, vector<4x256xf32>
    tpu.vector_store %arg13[%c0_43, %c17], %72 {strides = array<i32>} : memref<8x290xf32, #tpu.memory_space<vmem>>, vector<4x256xf32>,
    %74 = arith.truncf %72 : vector<4x256xf32> to vector<4x256xbf16>
    %c0_44 = arith.constant 0 : index
    %c0_45 = arith.constant 0 : index
    %75 = vector.load %arg2[%c0_44, %c0_45] : memref<256x192xbf16, #tpu.memory_space<vmem>>, vector<256x192xbf16>
    %cst_46 = arith.constant dense<0.000000e+00> : vector<4x192xf32>
    %76 = tpu.matmul %74, %75, %cst_46 {dimension_numbers = #tpu.dot_dimension_numbers<[1], [0], [0], [1], [0, 0, 1, 1], [], []>} : vector<4x256xbf16>, vector<256x192xbf16>, vector<4x192xf32> -> vector<4x192xf32>
    %c0_47 = arith.constant 0 : index
    %c64 = arith.constant 64 : index
    %77 = vector.load %arg10[%c0_47, %c64] : memref<4x320xf32, #tpu.memory_space<vmem>>, vector<4x192xf32>
    tpu.vector_store %arg10[%c0_47, %c64], %76 {strides = array<i32>} : memref<4x320xf32, #tpu.memory_space<vmem>>, vector<4x192xf32>,
    %c0_48 = arith.constant 0 : index
    %c0_49 = arith.constant 0 : index
    %78 = vector.load %arg10[%c0_48, %c0_49] : memref<4x320xf32, #tpu.memory_space<vmem>>, vector<4x320xf32>
    %cst_50 = arith.constant 0.000000e+00 : f32
    %79 = vector.broadcast %cst_50 : f32 to vector<4x192xf32>
    %80 = vector.extract_strided_slice %20 {offsets = [0, 0], sizes = [4, 1], strides = [1, 1]} : vector<4x16xf32> to vector<4x1xf32>
    %81 = vector.extract_strided_slice %78 {offsets = [0, 0], sizes = [4, 192], strides = [1, 1]} : vector<4x320xf32> to vector<4x192xf32>
    %82 = vector.broadcast %80 : vector<4x1xf32> to vector<4x192xf32>
    %83 = arith.mulf %82, %81 : vector<4x192xf32>
    %84 = arith.addf %79, %83 : vector<4x192xf32>
    %85 = vector.extract_strided_slice %20 {offsets = [0, 1], sizes = [4, 1], strides = [1, 1]} : vector<4x16xf32> to vector<4x1xf32>
    %86 = vector.extract_strided_slice %78 {offsets = [0, 16], sizes = [4, 192], strides = [1, 1]} : vector<4x320xf32> to vector<4x192xf32>
    %87 = vector.broadcast %85 : vector<4x1xf32> to vector<4x192xf32>
    %88 = arith.mulf %87, %86 : vector<4x192xf32>
    %89 = arith.addf %84, %88 : vector<4x192xf32>
    %90 = vector.extract_strided_slice %20 {offsets = [0, 2], sizes = [4, 1], strides = [1, 1]} : vector<4x16xf32> to vector<4x1xf32>
    %91 = vector.extract_strided_slice %78 {offsets = [0, 32], sizes = [4, 192], strides = [1, 1]} : vector<4x320xf32> to vector<4x192xf32>
    %92 = vector.broadcast %90 : vector<4x1xf32> to vector<4x192xf32>
    %93 = arith.mulf %92, %91 : vector<4x192xf32>
    %94 = arith.addf %89, %93 : vector<4x192xf32>
    %95 = vector.extract_strided_slice %20 {offsets = [0, 3], sizes = [4, 1], strides = [1, 1]} : vector<4x16xf32> to vector<4x1xf32>
    %96 = vector.extract_strided_slice %78 {offsets = [0, 48], sizes = [4, 192], strides = [1, 1]} : vector<4x320xf32> to vector<4x192xf32>
    %97 = vector.broadcast %95 : vector<4x1xf32> to vector<4x192xf32>
    %98 = arith.mulf %97, %96 : vector<4x192xf32>
    %99 = arith.addf %94, %98 : vector<4x192xf32>
    %100 = vector.extract_strided_slice %20 {offsets = [0, 4], sizes = [4, 1], strides = [1, 1]} : vector<4x16xf32> to vector<4x1xf32>
    %101 = vector.extract_strided_slice %78 {offsets = [0, 64], sizes = [4, 192], strides = [1, 1]} : vector<4x320xf32> to vector<4x192xf32>
    %102 = vector.broadcast %100 : vector<4x1xf32> to vector<4x192xf32>
    %103 = arith.mulf %102, %101 : vector<4x192xf32>
    %104 = arith.addf %99, %103 : vector<4x192xf32>
    %105 = vector.extract_strided_slice %20 {offsets = [0, 5], sizes = [4, 1], strides = [1, 1]} : vector<4x16xf32> to vector<4x1xf32>
    %106 = vector.extract_strided_slice %78 {offsets = [0, 80], sizes = [4, 192], strides = [1, 1]} : vector<4x320xf32> to vector<4x192xf32>
    %107 = vector.broadcast %105 : vector<4x1xf32> to vector<4x192xf32>
    %108 = arith.mulf %107, %106 : vector<4x192xf32>
    %109 = arith.addf %104, %108 : vector<4x192xf32>
    %110 = vector.extract_strided_slice %20 {offsets = [0, 6], sizes = [4, 1], strides = [1, 1]} : vector<4x16xf32> to vector<4x1xf32>
    %111 = vector.extract_strided_slice %78 {offsets = [0, 96], sizes = [4, 192], strides = [1, 1]} : vector<4x320xf32> to vector<4x192xf32>
    %112 = vector.broadcast %110 : vector<4x1xf32> to vector<4x192xf32>
    %113 = arith.mulf %112, %111 : vector<4x192xf32>
    %114 = arith.addf %109, %113 : vector<4x192xf32>
    %115 = vector.extract_strided_slice %20 {offsets = [0, 7], sizes = [4, 1], strides = [1, 1]} : vector<4x16xf32> to vector<4x1xf32>
    %116 = vector.extract_strided_slice %78 {offsets = [0, 112], sizes = [4, 192], strides = [1, 1]} : vector<4x320xf32> to vector<4x192xf32>
    %117 = vector.broadcast %115 : vector<4x1xf32> to vector<4x192xf32>
    %118 = arith.mulf %117, %116 : vector<4x192xf32>
    %119 = arith.addf %114, %118 : vector<4x192xf32>
    %120 = vector.extract_strided_slice %20 {offsets = [0, 8], sizes = [4, 1], strides = [1, 1]} : vector<4x16xf32> to vector<4x1xf32>
    %121 = vector.extract_strided_slice %78 {offsets = [0, 128], sizes = [4, 192], strides = [1, 1]} : vector<4x320xf32> to vector<4x192xf32>
    %122 = vector.broadcast %120 : vector<4x1xf32> to vector<4x192xf32>
    %123 = arith.mulf %122, %121 : vector<4x192xf32>
    %124 = arith.addf %119, %123 : vector<4x192xf32>
    %125 = vector.extract_strided_slice %20 {offsets = [0, 9], sizes = [4, 1], strides = [1, 1]} : vector<4x16xf32> to vector<4x1xf32>
    %126 = vector.broadcast %125 : vector<4x1xf32> to vector<4x192xf32>
    %127 = arith.addf %124, %126 : vector<4x192xf32>
    %cst_51 = arith.constant 0.000000e+00 : f32
    %128 = vector.broadcast %cst_51 : f32 to vector<4x192xf32>
    %129 = arith.maximumf %127, %128 : vector<4x192xf32>
    %c0_52 = arith.constant 0 : index
    %c17_53 = arith.constant 17 : index
    %130 = vector.load %arg11[%c0_52, %c17_53] : memref<4x226xf32, #tpu.memory_space<vmem>>, vector<4x192xf32>
    tpu.vector_store %arg11[%c0_52, %c17_53], %129 {strides = array<i32>} : memref<4x226xf32, #tpu.memory_space<vmem>>, vector<4x192xf32>,
    %131 = vector.extract_strided_slice %20 {offsets = [0, 12], sizes = [4, 1], strides = [1, 1]} : vector<4x16xf32> to vector<4x1xf32>
    %c0_54 = arith.constant 0 : index
    %c0_55 = arith.constant 0 : index
    %132 = vector.load %arg11[%c0_54, %c0_55] : memref<4x226xf32, #tpu.memory_space<vmem>>, vector<4x226xf32>
    %133 = vector.extract_strided_slice %132 {offsets = [0, 0], sizes = [4, 192], strides = [1, 1]} : vector<4x226xf32> to vector<4x192xf32>
    %cst_56 = arith.constant 0.000000e+00 : f32
    %134 = vector.shape_cast %39 : vector<1x192xi1> to vector<1x192xi1>
    %135 = vector.broadcast %134 : vector<1x192xi1> to vector<4x192xi1>
    %136 = vector.broadcast %cst_56 : f32 to vector<4x192xf32>
    %137 = arith.select %135, %133, %136 : vector<4x192xi1>, vector<4x192xf32>
    %c0_57 = arith.constant 0 : index
    %c0_58 = arith.constant 0 : index
    %138 = vector.load %arg15[%c0_57, %c0_58] : memref<36x192xf32, #tpu.memory_space<vmem>>, vector<4x192xf32>
    tpu.vector_store %arg15[%c0_57, %c0_58], %137 {strides = array<i32>} : memref<36x192xf32, #tpu.memory_space<vmem>>, vector<4x192xf32>,
    %139 = vector.extract_strided_slice %132 {offsets = [0, 1], sizes = [4, 192], strides = [1, 1]} : vector<4x226xf32> to vector<4x192xf32>
    %c4 = arith.constant 4 : index
    %c0_59 = arith.constant 0 : index
    %140 = vector.load %arg15[%c4, %c0_59] : memref<36x192xf32, #tpu.memory_space<vmem>>, vector<4x192xf32>
    tpu.vector_store %arg15[%c4, %c0_59], %139 {strides = array<i32>} : memref<36x192xf32, #tpu.memory_space<vmem>>, vector<4x192xf32>,
    %141 = vector.extract_strided_slice %132 {offsets = [0, 2], sizes = [4, 192], strides = [1, 1]} : vector<4x226xf32> to vector<4x192xf32>
    %cst_60 = arith.constant 0.000000e+00 : f32
    %142 = vector.shape_cast %41 : vector<1x192xi1> to vector<1x192xi1>
    %143 = vector.broadcast %142 : vector<1x192xi1> to vector<4x192xi1>
    %144 = vector.broadcast %cst_60 : f32 to vector<4x192xf32>
    %145 = arith.select %143, %141, %144 : vector<4x192xi1>, vector<4x192xf32>
    %c8 = arith.constant 8 : index
    %c0_61 = arith.constant 0 : index
    %146 = vector.load %arg15[%c8, %c0_61] : memref<36x192xf32, #tpu.memory_space<vmem>>, vector<4x192xf32>
    tpu.vector_store %arg15[%c8, %c0_61], %145 {strides = array<i32>} : memref<36x192xf32, #tpu.memory_space<vmem>>, vector<4x192xf32>,
    %147 = vector.extract_strided_slice %132 {offsets = [0, 16], sizes = [4, 192], strides = [1, 1]} : vector<4x226xf32> to vector<4x192xf32>
    %cst_62 = arith.constant 0.000000e+00 : f32
    %148 = vector.shape_cast %39 : vector<1x192xi1> to vector<1x192xi1>
    %149 = vector.broadcast %148 : vector<1x192xi1> to vector<4x192xi1>
    %150 = vector.broadcast %cst_62 : f32 to vector<4x192xf32>
    %151 = arith.select %149, %147, %150 : vector<4x192xi1>, vector<4x192xf32>
    %c12 = arith.constant 12 : index
    %c0_63 = arith.constant 0 : index
    %152 = vector.load %arg15[%c12, %c0_63] : memref<36x192xf32, #tpu.memory_space<vmem>>, vector<4x192xf32>
    tpu.vector_store %arg15[%c12, %c0_63], %151 {strides = array<i32>} : memref<36x192xf32, #tpu.memory_space<vmem>>, vector<4x192xf32>,
    %153 = vector.extract_strided_slice %132 {offsets = [0, 17], sizes = [4, 192], strides = [1, 1]} : vector<4x226xf32> to vector<4x192xf32>
    %c16 = arith.constant 16 : index
    %c0_64 = arith.constant 0 : index
    %154 = vector.load %arg15[%c16, %c0_64] : memref<36x192xf32, #tpu.memory_space<vmem>>, vector<4x192xf32>
    tpu.vector_store %arg15[%c16, %c0_64], %153 {strides = array<i32>} : memref<36x192xf32, #tpu.memory_space<vmem>>, vector<4x192xf32>,
    %155 = vector.extract_strided_slice %132 {offsets = [0, 18], sizes = [4, 192], strides = [1, 1]} : vector<4x226xf32> to vector<4x192xf32>
    %cst_65 = arith.constant 0.000000e+00 : f32
    %156 = vector.shape_cast %41 : vector<1x192xi1> to vector<1x192xi1>
    %157 = vector.broadcast %156 : vector<1x192xi1> to vector<4x192xi1>
    %158 = vector.broadcast %cst_65 : f32 to vector<4x192xf32>
    %159 = arith.select %157, %155, %158 : vector<4x192xi1>, vector<4x192xf32>
    %c20 = arith.constant 20 : index
    %c0_66 = arith.constant 0 : index
    %160 = vector.load %arg15[%c20, %c0_66] : memref<36x192xf32, #tpu.memory_space<vmem>>, vector<4x192xf32>
    tpu.vector_store %arg15[%c20, %c0_66], %159 {strides = array<i32>} : memref<36x192xf32, #tpu.memory_space<vmem>>, vector<4x192xf32>,
    %161 = vector.extract_strided_slice %132 {offsets = [0, 32], sizes = [4, 192], strides = [1, 1]} : vector<4x226xf32> to vector<4x192xf32>
    %cst_67 = arith.constant 0.000000e+00 : f32
    %162 = vector.shape_cast %39 : vector<1x192xi1> to vector<1x192xi1>
    %163 = vector.broadcast %162 : vector<1x192xi1> to vector<4x192xi1>
    %164 = vector.broadcast %cst_67 : f32 to vector<4x192xf32>
    %165 = arith.select %163, %161, %164 : vector<4x192xi1>, vector<4x192xf32>
    %c24 = arith.constant 24 : index
    %c0_68 = arith.constant 0 : index
    %166 = vector.load %arg15[%c24, %c0_68] : memref<36x192xf32, #tpu.memory_space<vmem>>, vector<4x192xf32>
    tpu.vector_store %arg15[%c24, %c0_68], %165 {strides = array<i32>} : memref<36x192xf32, #tpu.memory_space<vmem>>, vector<4x192xf32>,
    %167 = vector.extract_strided_slice %132 {offsets = [0, 33], sizes = [4, 192], strides = [1, 1]} : vector<4x226xf32> to vector<4x192xf32>
    %c28 = arith.constant 28 : index
    %c0_69 = arith.constant 0 : index
    %168 = vector.load %arg15[%c28, %c0_69] : memref<36x192xf32, #tpu.memory_space<vmem>>, vector<4x192xf32>
    tpu.vector_store %arg15[%c28, %c0_69], %167 {strides = array<i32>} : memref<36x192xf32, #tpu.memory_space<vmem>>, vector<4x192xf32>,
    %169 = vector.extract_strided_slice %132 {offsets = [0, 34], sizes = [4, 192], strides = [1, 1]} : vector<4x226xf32> to vector<4x192xf32>
    %cst_70 = arith.constant 0.000000e+00 : f32
    %170 = vector.shape_cast %41 : vector<1x192xi1> to vector<1x192xi1>
    %171 = vector.broadcast %170 : vector<1x192xi1> to vector<4x192xi1>
    %172 = vector.broadcast %cst_70 : f32 to vector<4x192xf32>
    %173 = arith.select %171, %169, %172 : vector<4x192xi1>, vector<4x192xf32>
    %c32 = arith.constant 32 : index
    %c0_71 = arith.constant 0 : index
    %174 = vector.load %arg15[%c32, %c0_71] : memref<36x192xf32, #tpu.memory_space<vmem>>, vector<4x192xf32>
    tpu.vector_store %arg15[%c32, %c0_71], %173 {strides = array<i32>} : memref<36x192xf32, #tpu.memory_space<vmem>>, vector<4x192xf32>,
    %c0_72 = arith.constant 0 : index
    %c0_73 = arith.constant 0 : index
    %175 = vector.load %arg5[%c0_72, %c0_73] : memref<4x36xbf16, #tpu.memory_space<vmem>>, vector<4x36xbf16>
    %c0_74 = arith.constant 0 : index
    %c0_75 = arith.constant 0 : index
    %176 = vector.load %arg15[%c0_74, %c0_75] : memref<36x192xf32, #tpu.memory_space<vmem>>, vector<36x192xf32>
    %177 = arith.truncf %176 : vector<36x192xf32> to vector<36x192xbf16>
    %cst_76 = arith.constant dense<0.000000e+00> : vector<4x192xf32>
    %178 = tpu.matmul %175, %177, %cst_76 {dimension_numbers = #tpu.dot_dimension_numbers<[1], [0], [0], [1], [0, 0, 1, 1], [], []>} : vector<4x36xbf16>, vector<36x192xbf16>, vector<4x192xf32> -> vector<4x192xf32>
    %179 = vector.broadcast %131 : vector<4x1xf32> to vector<4x192xf32>
    %180 = arith.addf %178, %179 : vector<4x192xf32>
    %cst_77 = arith.constant 0.000000e+00 : f32
    %181 = vector.broadcast %cst_77 : f32 to vector<4x192xf32>
    %182 = arith.maximumf %180, %181 : vector<4x192xf32>
    %c0_78 = arith.constant 0 : index
    %c17_79 = arith.constant 17 : index
    %183 = vector.load %arg12[%c0_78, %c17_79] : memref<4x226xf32, #tpu.memory_space<vmem>>, vector<4x192xf32>
    tpu.vector_store %arg12[%c0_78, %c17_79], %182 {strides = array<i32>} : memref<4x226xf32, #tpu.memory_space<vmem>>, vector<4x192xf32>,
    %184 = vector.extract_strided_slice %20 {offsets = [0, 13], sizes = [4, 1], strides = [1, 1]} : vector<4x16xf32> to vector<4x1xf32>
    %c0_80 = arith.constant 0 : index
    %c0_81 = arith.constant 0 : index
    %185 = vector.load %arg12[%c0_80, %c0_81] : memref<4x226xf32, #tpu.memory_space<vmem>>, vector<4x226xf32>
    %186 = vector.extract_strided_slice %185 {offsets = [0, 0], sizes = [4, 192], strides = [1, 1]} : vector<4x226xf32> to vector<4x192xf32>
    %cst_82 = arith.constant 0.000000e+00 : f32
    %187 = vector.shape_cast %39 : vector<1x192xi1> to vector<1x192xi1>
    %188 = vector.broadcast %187 : vector<1x192xi1> to vector<4x192xi1>
    %189 = vector.broadcast %cst_82 : f32 to vector<4x192xf32>
    %190 = arith.select %188, %186, %189 : vector<4x192xi1>, vector<4x192xf32>
    %c0_83 = arith.constant 0 : index
    %c0_84 = arith.constant 0 : index
    %191 = vector.load %arg15[%c0_83, %c0_84] : memref<36x192xf32, #tpu.memory_space<vmem>>, vector<4x192xf32>
    tpu.vector_store %arg15[%c0_83, %c0_84], %190 {strides = array<i32>} : memref<36x192xf32, #tpu.memory_space<vmem>>, vector<4x192xf32>,
    %192 = vector.extract_strided_slice %185 {offsets = [0, 1], sizes = [4, 192], strides = [1, 1]} : vector<4x226xf32> to vector<4x192xf32>
    %c4_85 = arith.constant 4 : index
    %c0_86 = arith.constant 0 : index
    %193 = vector.load %arg15[%c4_85, %c0_86] : memref<36x192xf32, #tpu.memory_space<vmem>>, vector<4x192xf32>
    tpu.vector_store %arg15[%c4_85, %c0_86], %192 {strides = array<i32>} : memref<36x192xf32, #tpu.memory_space<vmem>>, vector<4x192xf32>,
    %194 = vector.extract_strided_slice %185 {offsets = [0, 2], sizes = [4, 192], strides = [1, 1]} : vector<4x226xf32> to vector<4x192xf32>
    %cst_87 = arith.constant 0.000000e+00 : f32
    %195 = vector.shape_cast %41 : vector<1x192xi1> to vector<1x192xi1>
    %196 = vector.broadcast %195 : vector<1x192xi1> to vector<4x192xi1>
    %197 = vector.broadcast %cst_87 : f32 to vector<4x192xf32>
    %198 = arith.select %196, %194, %197 : vector<4x192xi1>, vector<4x192xf32>
    %c8_88 = arith.constant 8 : index
    %c0_89 = arith.constant 0 : index
    %199 = vector.load %arg15[%c8_88, %c0_89] : memref<36x192xf32, #tpu.memory_space<vmem>>, vector<4x192xf32>
    tpu.vector_store %arg15[%c8_88, %c0_89], %198 {strides = array<i32>} : memref<36x192xf32, #tpu.memory_space<vmem>>, vector<4x192xf32>,
    %200 = vector.extract_strided_slice %185 {offsets = [0, 16], sizes = [4, 192], strides = [1, 1]} : vector<4x226xf32> to vector<4x192xf32>
    %cst_90 = arith.constant 0.000000e+00 : f32
    %201 = vector.shape_cast %39 : vector<1x192xi1> to vector<1x192xi1>
    %202 = vector.broadcast %201 : vector<1x192xi1> to vector<4x192xi1>
    %203 = vector.broadcast %cst_90 : f32 to vector<4x192xf32>
    %204 = arith.select %202, %200, %203 : vector<4x192xi1>, vector<4x192xf32>
    %c12_91 = arith.constant 12 : index
    %c0_92 = arith.constant 0 : index
    %205 = vector.load %arg15[%c12_91, %c0_92] : memref<36x192xf32, #tpu.memory_space<vmem>>, vector<4x192xf32>
    tpu.vector_store %arg15[%c12_91, %c0_92], %204 {strides = array<i32>} : memref<36x192xf32, #tpu.memory_space<vmem>>, vector<4x192xf32>,
    %206 = vector.extract_strided_slice %185 {offsets = [0, 17], sizes = [4, 192], strides = [1, 1]} : vector<4x226xf32> to vector<4x192xf32>
    %c16_93 = arith.constant 16 : index
    %c0_94 = arith.constant 0 : index
    %207 = vector.load %arg15[%c16_93, %c0_94] : memref<36x192xf32, #tpu.memory_space<vmem>>, vector<4x192xf32>
    tpu.vector_store %arg15[%c16_93, %c0_94], %206 {strides = array<i32>} : memref<36x192xf32, #tpu.memory_space<vmem>>, vector<4x192xf32>,
    %208 = vector.extract_strided_slice %185 {offsets = [0, 18], sizes = [4, 192], strides = [1, 1]} : vector<4x226xf32> to vector<4x192xf32>
    %cst_95 = arith.constant 0.000000e+00 : f32
    %209 = vector.shape_cast %41 : vector<1x192xi1> to vector<1x192xi1>
    %210 = vector.broadcast %209 : vector<1x192xi1> to vector<4x192xi1>
    %211 = vector.broadcast %cst_95 : f32 to vector<4x192xf32>
    %212 = arith.select %210, %208, %211 : vector<4x192xi1>, vector<4x192xf32>
    %c20_96 = arith.constant 20 : index
    %c0_97 = arith.constant 0 : index
    %213 = vector.load %arg15[%c20_96, %c0_97] : memref<36x192xf32, #tpu.memory_space<vmem>>, vector<4x192xf32>
    tpu.vector_store %arg15[%c20_96, %c0_97], %212 {strides = array<i32>} : memref<36x192xf32, #tpu.memory_space<vmem>>, vector<4x192xf32>,
    %214 = vector.extract_strided_slice %185 {offsets = [0, 32], sizes = [4, 192], strides = [1, 1]} : vector<4x226xf32> to vector<4x192xf32>
    %cst_98 = arith.constant 0.000000e+00 : f32
    %215 = vector.shape_cast %39 : vector<1x192xi1> to vector<1x192xi1>
    %216 = vector.broadcast %215 : vector<1x192xi1> to vector<4x192xi1>
    %217 = vector.broadcast %cst_98 : f32 to vector<4x192xf32>
    %218 = arith.select %216, %214, %217 : vector<4x192xi1>, vector<4x192xf32>
    %c24_99 = arith.constant 24 : index
    %c0_100 = arith.constant 0 : index
    %219 = vector.load %arg15[%c24_99, %c0_100] : memref<36x192xf32, #tpu.memory_space<vmem>>, vector<4x192xf32>
    tpu.vector_store %arg15[%c24_99, %c0_100], %218 {strides = array<i32>} : memref<36x192xf32, #tpu.memory_space<vmem>>, vector<4x192xf32>,
    %220 = vector.extract_strided_slice %185 {offsets = [0, 33], sizes = [4, 192], strides = [1, 1]} : vector<4x226xf32> to vector<4x192xf32>
    %c28_101 = arith.constant 28 : index
    %c0_102 = arith.constant 0 : index
    %221 = vector.load %arg15[%c28_101, %c0_102] : memref<36x192xf32, #tpu.memory_space<vmem>>, vector<4x192xf32>
    tpu.vector_store %arg15[%c28_101, %c0_102], %220 {strides = array<i32>} : memref<36x192xf32, #tpu.memory_space<vmem>>, vector<4x192xf32>,
    %222 = vector.extract_strided_slice %185 {offsets = [0, 34], sizes = [4, 192], strides = [1, 1]} : vector<4x226xf32> to vector<4x192xf32>
    %cst_103 = arith.constant 0.000000e+00 : f32
    %223 = vector.shape_cast %41 : vector<1x192xi1> to vector<1x192xi1>
    %224 = vector.broadcast %223 : vector<1x192xi1> to vector<4x192xi1>
    %225 = vector.broadcast %cst_103 : f32 to vector<4x192xf32>
    %226 = arith.select %224, %222, %225 : vector<4x192xi1>, vector<4x192xf32>
    %c32_104 = arith.constant 32 : index
    %c0_105 = arith.constant 0 : index
    %227 = vector.load %arg15[%c32_104, %c0_105] : memref<36x192xf32, #tpu.memory_space<vmem>>, vector<4x192xf32>
    tpu.vector_store %arg15[%c32_104, %c0_105], %226 {strides = array<i32>} : memref<36x192xf32, #tpu.memory_space<vmem>>, vector<4x192xf32>,
    %c0_106 = arith.constant 0 : index
    %c0_107 = arith.constant 0 : index
    %228 = vector.load %arg6[%c0_106, %c0_107] : memref<4x36xbf16, #tpu.memory_space<vmem>>, vector<4x36xbf16>
    %c0_108 = arith.constant 0 : index
    %c0_109 = arith.constant 0 : index
    %229 = vector.load %arg15[%c0_108, %c0_109] : memref<36x192xf32, #tpu.memory_space<vmem>>, vector<36x192xf32>
    %230 = arith.truncf %229 : vector<36x192xf32> to vector<36x192xbf16>
    %cst_110 = arith.constant dense<0.000000e+00> : vector<4x192xf32>
    %231 = tpu.matmul %228, %230, %cst_110 {dimension_numbers = #tpu.dot_dimension_numbers<[1], [0], [0], [1], [0, 0, 1, 1], [], []>} : vector<4x36xbf16>, vector<36x192xbf16>, vector<4x192xf32> -> vector<4x192xf32>
    %232 = vector.broadcast %184 : vector<4x1xf32> to vector<4x192xf32>
    %233 = arith.addf %231, %232 : vector<4x192xf32>
    %cst_111 = arith.constant 0.000000e+00 : f32
    %234 = vector.broadcast %cst_111 : f32 to vector<4x192xf32>
    %235 = arith.maximumf %233, %234 : vector<4x192xf32>
    %236 = arith.truncf %235 : vector<4x192xf32> to vector<4x192xbf16>
    %c0_112 = arith.constant 0 : index
    %c0_113 = arith.constant 0 : index
    %237 = vector.load %arg3[%c0_112, %c0_113] : memref<192x256xbf16, #tpu.memory_space<vmem>>, vector<192x256xbf16>
    %cst_114 = arith.constant dense<0.000000e+00> : vector<4x256xf32>
    %238 = tpu.matmul %236, %237, %cst_114 {dimension_numbers = #tpu.dot_dimension_numbers<[1], [0], [0], [1], [0, 0, 1, 1], [], []>} : vector<4x192xbf16>, vector<192x256xbf16>, vector<4x256xf32> -> vector<4x256xf32>
    %c4_115 = arith.constant 4 : index
    %c17_116 = arith.constant 17 : index
    %239 = vector.load %arg13[%c4_115, %c17_116] : memref<8x290xf32, #tpu.memory_space<vmem>>, vector<4x256xf32>
    tpu.vector_store %arg13[%c4_115, %c17_116], %238 {strides = array<i32>} : memref<8x290xf32, #tpu.memory_space<vmem>>, vector<4x256xf32>,
    %c0_117 = arith.constant 0 : index
    %c0_118 = arith.constant 0 : index
    %240 = vector.load %arg13[%c0_117, %c0_118] : memref<8x290xf32, #tpu.memory_space<vmem>>, vector<8x290xf32>
    %241 = vector.extract_strided_slice %240 {offsets = [0, 0], sizes = [8, 256], strides = [1, 1]} : vector<8x290xf32> to vector<8x256xf32>
    %cst_119 = arith.constant 0.000000e+00 : f32
    %242 = vector.shape_cast %60 : vector<1x256xi1> to vector<1x256xi1>
    %243 = vector.broadcast %242 : vector<1x256xi1> to vector<8x256xi1>
    %244 = vector.broadcast %cst_119 : f32 to vector<8x256xf32>
    %245 = arith.select %243, %241, %244 : vector<8x256xi1>, vector<8x256xf32>
    %c0_120 = arith.constant 0 : index
    %c0_121 = arith.constant 0 : index
    %246 = vector.load %arg16[%c0_120, %c0_121] : memref<144x256xf32, #tpu.memory_space<vmem>>, vector<8x256xf32>
    tpu.vector_store %arg16[%c0_120, %c0_121], %245 {strides = array<i32>} : memref<144x256xf32, #tpu.memory_space<vmem>>, vector<8x256xf32>,
    %247 = vector.extract_strided_slice %240 {offsets = [0, 1], sizes = [8, 256], strides = [1, 1]} : vector<8x290xf32> to vector<8x256xf32>
    %c8_122 = arith.constant 8 : index
    %c0_123 = arith.constant 0 : index
    %248 = vector.load %arg16[%c8_122, %c0_123] : memref<144x256xf32, #tpu.memory_space<vmem>>, vector<8x256xf32>
    tpu.vector_store %arg16[%c8_122, %c0_123], %247 {strides = array<i32>} : memref<144x256xf32, #tpu.memory_space<vmem>>, vector<8x256xf32>,
    %249 = vector.extract_strided_slice %240 {offsets = [0, 2], sizes = [8, 256], strides = [1, 1]} : vector<8x290xf32> to vector<8x256xf32>
    %cst_124 = arith.constant 0.000000e+00 : f32
    %250 = vector.shape_cast %62 : vector<1x256xi1> to vector<1x256xi1>
    %251 = vector.broadcast %250 : vector<1x256xi1> to vector<8x256xi1>
    %252 = vector.broadcast %cst_124 : f32 to vector<8x256xf32>
    %253 = arith.select %251, %249, %252 : vector<8x256xi1>, vector<8x256xf32>
    %c16_125 = arith.constant 16 : index
    %c0_126 = arith.constant 0 : index
    %254 = vector.load %arg16[%c16_125, %c0_126] : memref<144x256xf32, #tpu.memory_space<vmem>>, vector<8x256xf32>
    tpu.vector_store %arg16[%c16_125, %c0_126], %253 {strides = array<i32>} : memref<144x256xf32, #tpu.memory_space<vmem>>, vector<8x256xf32>,
    %255 = vector.extract_strided_slice %240 {offsets = [0, 16], sizes = [8, 256], strides = [1, 1]} : vector<8x290xf32> to vector<8x256xf32>
    %cst_127 = arith.constant 0.000000e+00 : f32
    %256 = vector.shape_cast %60 : vector<1x256xi1> to vector<1x256xi1>
    %257 = vector.broadcast %256 : vector<1x256xi1> to vector<8x256xi1>
    %258 = vector.broadcast %cst_127 : f32 to vector<8x256xf32>
    %259 = arith.select %257, %255, %258 : vector<8x256xi1>, vector<8x256xf32>
    %c24_128 = arith.constant 24 : index
    %c0_129 = arith.constant 0 : index
    %260 = vector.load %arg16[%c24_128, %c0_129] : memref<144x256xf32, #tpu.memory_space<vmem>>, vector<8x256xf32>
    tpu.vector_store %arg16[%c24_128, %c0_129], %259 {strides = array<i32>} : memref<144x256xf32, #tpu.memory_space<vmem>>, vector<8x256xf32>,
    %261 = vector.extract_strided_slice %240 {offsets = [0, 17], sizes = [8, 256], strides = [1, 1]} : vector<8x290xf32> to vector<8x256xf32>
    %c32_130 = arith.constant 32 : index
    %c0_131 = arith.constant 0 : index
    %262 = vector.load %arg16[%c32_130, %c0_131] : memref<144x256xf32, #tpu.memory_space<vmem>>, vector<8x256xf32>
    tpu.vector_store %arg16[%c32_130, %c0_131], %261 {strides = array<i32>} : memref<144x256xf32, #tpu.memory_space<vmem>>, vector<8x256xf32>,
    %263 = vector.extract_strided_slice %240 {offsets = [0, 18], sizes = [8, 256], strides = [1, 1]} : vector<8x290xf32> to vector<8x256xf32>
    %cst_132 = arith.constant 0.000000e+00 : f32
    %264 = vector.shape_cast %62 : vector<1x256xi1> to vector<1x256xi1>
    %265 = vector.broadcast %264 : vector<1x256xi1> to vector<8x256xi1>
    %266 = vector.broadcast %cst_132 : f32 to vector<8x256xf32>
    %267 = arith.select %265, %263, %266 : vector<8x256xi1>, vector<8x256xf32>
    %c40 = arith.constant 40 : index
    %c0_133 = arith.constant 0 : index
    %268 = vector.load %arg16[%c40, %c0_133] : memref<144x256xf32, #tpu.memory_space<vmem>>, vector<8x256xf32>
    tpu.vector_store %arg16[%c40, %c0_133], %267 {strides = array<i32>} : memref<144x256xf32, #tpu.memory_space<vmem>>, vector<8x256xf32>,
    %269 = vector.extract_strided_slice %240 {offsets = [0, 32], sizes = [8, 256], strides = [1, 1]} : vector<8x290xf32> to vector<8x256xf32>
    %cst_134 = arith.constant 0.000000e+00 : f32
    %270 = vector.shape_cast %60 : vector<1x256xi1> to vector<1x256xi1>
    %271 = vector.broadcast %270 : vector<1x256xi1> to vector<8x256xi1>
    %272 = vector.broadcast %cst_134 : f32 to vector<8x256xf32>
    %273 = arith.select %271, %269, %272 : vector<8x256xi1>, vector<8x256xf32>
    %c48 = arith.constant 48 : index
    %c0_135 = arith.constant 0 : index
    %274 = vector.load %arg16[%c48, %c0_135] : memref<144x256xf32, #tpu.memory_space<vmem>>, vector<8x256xf32>
    tpu.vector_store %arg16[%c48, %c0_135], %273 {strides = array<i32>} : memref<144x256xf32, #tpu.memory_space<vmem>>, vector<8x256xf32>,
    %275 = vector.extract_strided_slice %240 {offsets = [0, 33], sizes = [8, 256], strides = [1, 1]} : vector<8x290xf32> to vector<8x256xf32>
    %c56 = arith.constant 56 : index
    %c0_136 = arith.constant 0 : index
    %276 = vector.load %arg16[%c56, %c0_136] : memref<144x256xf32, #tpu.memory_space<vmem>>, vector<8x256xf32>
    tpu.vector_store %arg16[%c56, %c0_136], %275 {strides = array<i32>} : memref<144x256xf32, #tpu.memory_space<vmem>>, vector<8x256xf32>,
    %277 = vector.extract_strided_slice %240 {offsets = [0, 34], sizes = [8, 256], strides = [1, 1]} : vector<8x290xf32> to vector<8x256xf32>
    %cst_137 = arith.constant 0.000000e+00 : f32
    %278 = vector.shape_cast %62 : vector<1x256xi1> to vector<1x256xi1>
    %279 = vector.broadcast %278 : vector<1x256xi1> to vector<8x256xi1>
    %280 = vector.broadcast %cst_137 : f32 to vector<8x256xf32>
    %281 = arith.select %279, %277, %280 : vector<8x256xi1>, vector<8x256xf32>
    %c64_138 = arith.constant 64 : index
    %c0_139 = arith.constant 0 : index
    %282 = vector.load %arg16[%c64_138, %c0_139] : memref<144x256xf32, #tpu.memory_space<vmem>>, vector<8x256xf32>
    tpu.vector_store %arg16[%c64_138, %c0_139], %281 {strides = array<i32>} : memref<144x256xf32, #tpu.memory_space<vmem>>, vector<8x256xf32>,
    %c0_140 = arith.constant 0 : index
    %c0_141 = arith.constant 0 : index
    %283 = vector.load %arg7[%c0_140, %c0_141] : memref<16x72xbf16, #tpu.memory_space<vmem>>, vector<16x72xbf16>
    %c0_142 = arith.constant 0 : index
    %c0_143 = arith.constant 0 : index
    %284 = vector.load %arg16[%c0_142, %c0_143] : memref<144x256xf32, #tpu.memory_space<vmem>>, vector<72x256xf32>
    %285 = arith.truncf %284 : vector<72x256xf32> to vector<72x256xbf16>
    %cst_144 = arith.constant dense<0.000000e+00> : vector<16x256xf32>
    %286 = tpu.matmul %283, %285, %cst_144 {dimension_numbers = #tpu.dot_dimension_numbers<[1], [0], [0], [1], [0, 0, 1, 1], [], []>} : vector<16x72xbf16>, vector<72x256xbf16>, vector<16x256xf32> -> vector<16x256xf32>
    %cst_145 = arith.constant 0.000000e+00 : f32
    %287 = vector.broadcast %cst_145 : f32 to vector<16x256xf32>
    %288 = arith.maximumf %286, %287 : vector<16x256xf32>
    %c0_146 = arith.constant 0 : index
    %c17_147 = arith.constant 17 : index
    %289 = vector.load %arg14[%c0_146, %c17_147] : memref<16x290xf32, #tpu.memory_space<vmem>>, vector<16x256xf32>
    tpu.vector_store %arg14[%c0_146, %c17_147], %288 {strides = array<i32>} : memref<16x290xf32, #tpu.memory_space<vmem>>, vector<16x256xf32>,
    %c0_148 = arith.constant 0 : index
    %c0_149 = arith.constant 0 : index
    %290 = vector.load %arg14[%c0_148, %c0_149] : memref<16x290xf32, #tpu.memory_space<vmem>>, vector<16x290xf32>
    %291 = vector.extract_strided_slice %290 {offsets = [0, 0], sizes = [16, 256], strides = [1, 1]} : vector<16x290xf32> to vector<16x256xf32>
    %cst_150 = arith.constant 0.000000e+00 : f32
    %292 = vector.shape_cast %60 : vector<1x256xi1> to vector<1x256xi1>
    %293 = vector.broadcast %292 : vector<1x256xi1> to vector<16x256xi1>
    %294 = vector.broadcast %cst_150 : f32 to vector<16x256xf32>
    %295 = arith.select %293, %291, %294 : vector<16x256xi1>, vector<16x256xf32>
    %c0_151 = arith.constant 0 : index
    %c0_152 = arith.constant 0 : index
    %296 = vector.load %arg16[%c0_151, %c0_152] : memref<144x256xf32, #tpu.memory_space<vmem>>, vector<16x256xf32>
    tpu.vector_store %arg16[%c0_151, %c0_152], %295 {strides = array<i32>} : memref<144x256xf32, #tpu.memory_space<vmem>>, vector<16x256xf32>,
    %297 = vector.extract_strided_slice %290 {offsets = [0, 1], sizes = [16, 256], strides = [1, 1]} : vector<16x290xf32> to vector<16x256xf32>
    %c16_153 = arith.constant 16 : index
    %c0_154 = arith.constant 0 : index
    %298 = vector.load %arg16[%c16_153, %c0_154] : memref<144x256xf32, #tpu.memory_space<vmem>>, vector<16x256xf32>
    tpu.vector_store %arg16[%c16_153, %c0_154], %297 {strides = array<i32>} : memref<144x256xf32, #tpu.memory_space<vmem>>, vector<16x256xf32>,
    %299 = vector.extract_strided_slice %290 {offsets = [0, 2], sizes = [16, 256], strides = [1, 1]} : vector<16x290xf32> to vector<16x256xf32>
    %cst_155 = arith.constant 0.000000e+00 : f32
    %300 = vector.shape_cast %62 : vector<1x256xi1> to vector<1x256xi1>
    %301 = vector.broadcast %300 : vector<1x256xi1> to vector<16x256xi1>
    %302 = vector.broadcast %cst_155 : f32 to vector<16x256xf32>
    %303 = arith.select %301, %299, %302 : vector<16x256xi1>, vector<16x256xf32>
    %c32_156 = arith.constant 32 : index
    %c0_157 = arith.constant 0 : index
    %304 = vector.load %arg16[%c32_156, %c0_157] : memref<144x256xf32, #tpu.memory_space<vmem>>, vector<16x256xf32>
    tpu.vector_store %arg16[%c32_156, %c0_157], %303 {strides = array<i32>} : memref<144x256xf32, #tpu.memory_space<vmem>>, vector<16x256xf32>,
    %305 = vector.extract_strided_slice %290 {offsets = [0, 16], sizes = [16, 256], strides = [1, 1]} : vector<16x290xf32> to vector<16x256xf32>
    %cst_158 = arith.constant 0.000000e+00 : f32
    %306 = vector.shape_cast %60 : vector<1x256xi1> to vector<1x256xi1>
    %307 = vector.broadcast %306 : vector<1x256xi1> to vector<16x256xi1>
    %308 = vector.broadcast %cst_158 : f32 to vector<16x256xf32>
    %309 = arith.select %307, %305, %308 : vector<16x256xi1>, vector<16x256xf32>
    %c48_159 = arith.constant 48 : index
    %c0_160 = arith.constant 0 : index
    %310 = vector.load %arg16[%c48_159, %c0_160] : memref<144x256xf32, #tpu.memory_space<vmem>>, vector<16x256xf32>
    tpu.vector_store %arg16[%c48_159, %c0_160], %309 {strides = array<i32>} : memref<144x256xf32, #tpu.memory_space<vmem>>, vector<16x256xf32>,
    %311 = vector.extract_strided_slice %290 {offsets = [0, 17], sizes = [16, 256], strides = [1, 1]} : vector<16x290xf32> to vector<16x256xf32>
    %c64_161 = arith.constant 64 : index
    %c0_162 = arith.constant 0 : index
    %312 = vector.load %arg16[%c64_161, %c0_162] : memref<144x256xf32, #tpu.memory_space<vmem>>, vector<16x256xf32>
    tpu.vector_store %arg16[%c64_161, %c0_162], %311 {strides = array<i32>} : memref<144x256xf32, #tpu.memory_space<vmem>>, vector<16x256xf32>,
    %313 = vector.extract_strided_slice %290 {offsets = [0, 18], sizes = [16, 256], strides = [1, 1]} : vector<16x290xf32> to vector<16x256xf32>
    %cst_163 = arith.constant 0.000000e+00 : f32
    %314 = vector.shape_cast %62 : vector<1x256xi1> to vector<1x256xi1>
    %315 = vector.broadcast %314 : vector<1x256xi1> to vector<16x256xi1>
    %316 = vector.broadcast %cst_163 : f32 to vector<16x256xf32>
    %317 = arith.select %315, %313, %316 : vector<16x256xi1>, vector<16x256xf32>
    %c80 = arith.constant 80 : index
    %c0_164 = arith.constant 0 : index
    %318 = vector.load %arg16[%c80, %c0_164] : memref<144x256xf32, #tpu.memory_space<vmem>>, vector<16x256xf32>
    tpu.vector_store %arg16[%c80, %c0_164], %317 {strides = array<i32>} : memref<144x256xf32, #tpu.memory_space<vmem>>, vector<16x256xf32>,
    %319 = vector.extract_strided_slice %290 {offsets = [0, 32], sizes = [16, 256], strides = [1, 1]} : vector<16x290xf32> to vector<16x256xf32>
    %cst_165 = arith.constant 0.000000e+00 : f32
    %320 = vector.shape_cast %60 : vector<1x256xi1> to vector<1x256xi1>
    %321 = vector.broadcast %320 : vector<1x256xi1> to vector<16x256xi1>
    %322 = vector.broadcast %cst_165 : f32 to vector<16x256xf32>
    %323 = arith.select %321, %319, %322 : vector<16x256xi1>, vector<16x256xf32>
    %c96 = arith.constant 96 : index
    %c0_166 = arith.constant 0 : index
    %324 = vector.load %arg16[%c96, %c0_166] : memref<144x256xf32, #tpu.memory_space<vmem>>, vector<16x256xf32>
    tpu.vector_store %arg16[%c96, %c0_166], %323 {strides = array<i32>} : memref<144x256xf32, #tpu.memory_space<vmem>>, vector<16x256xf32>,
    %325 = vector.extract_strided_slice %290 {offsets = [0, 33], sizes = [16, 256], strides = [1, 1]} : vector<16x290xf32> to vector<16x256xf32>
    %c112 = arith.constant 112 : index
    %c0_167 = arith.constant 0 : index
    %326 = vector.load %arg16[%c112, %c0_167] : memref<144x256xf32, #tpu.memory_space<vmem>>, vector<16x256xf32>
    tpu.vector_store %arg16[%c112, %c0_167], %325 {strides = array<i32>} : memref<144x256xf32, #tpu.memory_space<vmem>>, vector<16x256xf32>,
    %327 = vector.extract_strided_slice %290 {offsets = [0, 34], sizes = [16, 256], strides = [1, 1]} : vector<16x290xf32> to vector<16x256xf32>
    %cst_168 = arith.constant 0.000000e+00 : f32
    %328 = vector.shape_cast %62 : vector<1x256xi1> to vector<1x256xi1>
    %329 = vector.broadcast %328 : vector<1x256xi1> to vector<16x256xi1>
    %330 = vector.broadcast %cst_168 : f32 to vector<16x256xf32>
    %331 = arith.select %329, %327, %330 : vector<16x256xi1>, vector<16x256xf32>
    %c128 = arith.constant 128 : index
    %c0_169 = arith.constant 0 : index
    %332 = vector.load %arg16[%c128, %c0_169] : memref<144x256xf32, #tpu.memory_space<vmem>>, vector<16x256xf32>
    tpu.vector_store %arg16[%c128, %c0_169], %331 {strides = array<i32>} : memref<144x256xf32, #tpu.memory_space<vmem>>, vector<16x256xf32>,
    %c0_170 = arith.constant 0 : index
    %c0_171 = arith.constant 0 : index
    %333 = vector.load %arg8[%c0_170, %c0_171] : memref<4x144xbf16, #tpu.memory_space<vmem>>, vector<4x144xbf16>
    %c0_172 = arith.constant 0 : index
    %c0_173 = arith.constant 0 : index
    %334 = vector.load %arg16[%c0_172, %c0_173] : memref<144x256xf32, #tpu.memory_space<vmem>>, vector<144x256xf32>
    %335 = arith.truncf %334 : vector<144x256xf32> to vector<144x256xbf16>
    %cst_174 = arith.constant dense<0.000000e+00> : vector<4x256xf32>
    %336 = tpu.matmul %333, %335, %cst_174 {dimension_numbers = #tpu.dot_dimension_numbers<[1], [0], [0], [1], [0, 0, 1, 1], [], []>} : vector<4x144xbf16>, vector<144x256xbf16>, vector<4x256xf32> -> vector<4x256xf32>
    %c0_175 = arith.constant 0 : index
    %c0_176 = arith.constant 0 : index
    %c0_177 = arith.constant 0 : index
    %337 = vector.load %arg9[%c0_175, %c0_176, %c0_177] : memref<1x4x256xf32, #tpu.memory_space<vmem>>, vector<1x4x256xf32>
    %338 = vector.shape_cast %337 : vector<1x4x256xf32> to vector<4x256xf32>
    %339 = vector.shape_cast %336 : vector<4x256xf32> to vector<1x4x256xf32>
    tpu.vector_store %arg9[%c0_175, %c0_176, %c0_177], %339 {strides = array<i32>} : memref<1x4x256xf32, #tpu.memory_space<vmem>>, vector<1x4x256xf32>,
    return
  }
  func.func @transform_0(%arg0: i32) -> (i32, i32, i32) {
    %c0_i32 = arith.constant 0 : i32
    %c0_i32_0 = arith.constant 0 : i32
    %c0_i32_1 = arith.constant 0 : i32
    return %arg0, %c0_i32, %c0_i32_0 : i32, i32, i32
  }
  func.func @transform_1(%arg0: i32) -> (i32, i32) {
    %c0_i32 = arith.constant 0 : i32
    %c0_i32_0 = arith.constant 0 : i32
    %c0_i32_1 = arith.constant 0 : i32
    return %c0_i32, %c0_i32_0 : i32, i32
  }
  func.func @transform_2(%arg0: i32) -> (i32, i32) {
    %c0_i32 = arith.constant 0 : i32
    %c0_i32_0 = arith.constant 0 : i32
    %c0_i32_1 = arith.constant 0 : i32
    return %c0_i32, %c0_i32_0 : i32, i32
  }
  func.func @transform_3(%arg0: i32) -> (i32, i32) {
    %c0_i32 = arith.constant 0 : i32
    %c0_i32_0 = arith.constant 0 : i32
    %c0_i32_1 = arith.constant 0 : i32
    return %c0_i32, %c0_i32_0 : i32, i32
  }
  func.func @transform_4(%arg0: i32) -> (i32, i32) {
    %c0_i32 = arith.constant 0 : i32
    %c0_i32_0 = arith.constant 0 : i32
    %c0_i32_1 = arith.constant 0 : i32
    return %c0_i32, %c0_i32_0 : i32, i32
  }
  func.func @transform_5(%arg0: i32) -> (i32, i32) {
    %c0_i32 = arith.constant 0 : i32
    %c0_i32_0 = arith.constant 0 : i32
    %c0_i32_1 = arith.constant 0 : i32
    return %c0_i32, %c0_i32_0 : i32, i32
  }
  func.func @transform_6(%arg0: i32) -> (i32, i32) {
    %c0_i32 = arith.constant 0 : i32
    %c0_i32_0 = arith.constant 0 : i32
    %c0_i32_1 = arith.constant 0 : i32
    return %c0_i32, %c0_i32_0 : i32, i32
  }
  func.func @transform_7(%arg0: i32) -> (i32, i32) {
    %c0_i32 = arith.constant 0 : i32
    %c0_i32_0 = arith.constant 0 : i32
    %c0_i32_1 = arith.constant 0 : i32
    return %c0_i32, %c0_i32_0 : i32, i32
  }
  func.func @transform_8(%arg0: i32) -> (i32, i32, i32) {
    %c0_i32 = arith.constant 0 : i32
    %c0_i32_0 = arith.constant 0 : i32
    %c0_i32_1 = arith.constant 0 : i32
    return %arg0, %c0_i32, %c0_i32_0 : i32, i32, i32
  }
}

</mosaic_0001>

<llo_original>
// kernel: cat_htiht_forward.1
$region0: #{cat_htiht_forward.1}
  #allocation0 [shape = 'u32[]', space=smem, size = 0x4, offset = 0x4, fixed_abs, tag = 'smem constant byte address 0x4 - core index']
  #allocation1 [shape = 'u32[72,128]{1,0:T(1,128)}', space=vmem, size = 0x9000, scoped, tag = 'internal scratch']
  #allocation2 [shape = 'f32[4,320]{1,0:T(4,128)}', space=vmem, size = 0x1800, scoped, tag = 'scratch operand']
  #allocation3 [shape = 'f32[4,226]{1,0:T(4,128)}', space=vmem, size = 0x1000, scoped, tag = 'scratch operand']
  #allocation4 [shape = 'f32[4,226]{1,0:T(4,128)}', space=vmem, size = 0x1000, scoped, tag = 'scratch operand']
  #allocation5 [shape = 'f32[8,290]{1,0:T(8,128)}', space=vmem, size = 0x3000, scoped, tag = 'scratch operand']
  #allocation6 [shape = 'f32[16,290]{1,0:T(8,128)}', space=vmem, size = 0x6000, scoped, tag = 'scratch operand']
  #allocation7 [shape = 'f32[36,192]{1,0:T(8,128)}', space=vmem, size = 0xa000, scoped, tag = 'scratch operand']
  #allocation8 [shape = 'f32[144,256]{1,0:T(8,128)}', space=vmem, size = 0x24000, scoped, tag = 'scratch operand']
  %s0 = inlined_call_operand.vmem [shape: f32[2,4,256], index: 0, kind: input, shape index: {}]
  %s1 = inlined_call_operand.vmem [shape: bf16[256,192], index: 1, kind: input, shape index: {}]
  %s2 = inlined_call_operand.vmem [shape: bf16[192,256], index: 2, kind: input, shape index: {}]
  %s3 = inlined_call_operand.vmem [shape: f32[4,16], index: 3, kind: input, shape index: {}]
  %s4 = inlined_call_operand.vmem [shape: bf16[4,36], index: 4, kind: input, shape index: {}]
  %s5 = inlined_call_operand.vmem [shape: bf16[4,36], index: 5, kind: input, shape index: {}]
  %s6 = inlined_call_operand.vmem [shape: bf16[16,72], index: 6, kind: input, shape index: {}]
  %s7 = inlined_call_operand.vmem [shape: bf16[4,144], index: 7, kind: input, shape index: {}]
  %s8 = inlined_call_operand.vmem [shape: f32[2,4,256], index: 8, kind: output, shape index: {}]
  %s9 = sld [smem:[#allocation0]]
  $region65: #{cat_htiht_forward.1} parent=0
    _
  %s11 = ssub.s32 1, %s9
  %s12 = scalar_select 0, %s11, %s9
  loop: start=0, step=1, limit=4
  $region2: #{cat_htiht_forward.1} parent=0 // loop_pre_header
    _
  $region3: #{cat_htiht_forward.1} parent=0 // loop_header
    %s14 = sphi 0, %s18
    %p15 = scmp.ge.s32.totalorder %s14, 4
    %s24 = sphi 0, %s26
    %s27 = sphi 0, %s24
    %s28 = sphi 0, %s27
    %s44 = sphi 0, %s28
    %s48 = sphi 0, %s48
    %s50 = sphi 0, %s48
    %s51 = sphi 0, %s50
    %s65 = sphi 0, %s51
    %s69 = sphi 0, %s69
    %s71 = sphi 0, %s69
    %s72 = sphi 0, %s71
    %s86 = sphi 0, %s72
    %s90 = sphi 0, %s90
    %s92 = sphi 0, %s90
    %s93 = sphi 0, %s92
    %s107 = sphi 0, %s93
    %s111 = sphi 0, %s111
    %s113 = sphi 0, %s111
    %s114 = sphi 0, %s113
    %s128 = sphi 0, %s114
    %s132 = sphi 0, %s132
    %s134 = sphi 0, %s132
    %s135 = sphi 0, %s134
    %s149 = sphi 0, %s135
    %s153 = sphi 0, %s153
    %s155 = sphi 0, %s153
    %s156 = sphi 0, %s155
    %s170 = sphi 0, %s156
    %s174 = sphi 0, %s174
    %s176 = sphi 0, %s174
    %s177 = sphi 0, %s176
    %s191 = sphi 0, %s177
    %s197 = sphi 0, %s199
    %s200 = sphi 0, %s197
    %s201 = sphi 0, %s200
    %s217 = sphi 0, %s201
  $region4: #{cat_htiht_forward.1} parent=0 // loop_header_branch
    %17 = sbr.rel (%p15) target = $region8
  $region5: #{cat_htiht_forward.1} parent=0 // loop_body
    %s19 = ssub.s32 %s14, 1
    %s20 = ssub.s32 %s14, 2
    %s21 = sadd.s32 %s14, 1
    %s22 = ssub.s32 %s14, %s21
    %p23 = scmp.eq.s32.totalorder %s22, 0
    %s25 = sadd.s32 %s24, 1
    %s26 = scalar_select %p23, %s24, %s25
    %p29 = pneg %p23
    %p30 = scmp.eq.s32.totalorder %s14, 1
    %p31 = por %p29, %p30
    %p32 = scmp.ne.s32.totalorder %s24, %s27
    %p33 = scmp.eq.s32.totalorder %s14, 0
    %p34 = por %p32, %p33
    %p35 = scmp.ne.s32.totalorder %s24, %s27
    %p36 = scmp.eq.s32.totalorder %s19, 1
    %p37 = por %p35, %p36
    %p38 = scmp.ne.s32.totalorder %s27, %s28
    %p39 = scmp.eq.s32.totalorder %s19, 0
    %p40 = por %p38, %p39
    %p41 = scmp.ne.s32.totalorder %s27, %s28
    %p42 = scmp.eq.s32.totalorder %s20, 1
    %p43 = por %p41, %p42
    %p45 = scmp.ne.s32.totalorder %s28, %s44
    %p46 = scmp.eq.s32.totalorder %s20, 0
    %p47 = por %p45, %p46
    %s49 = sadd.s32 %s48, 1
    %p52 = scmp.eq.s32.totalorder %s14, 1
    %p53 = scmp.ne.s32.totalorder %s48, %s50
    %p54 = scmp.eq.s32.totalorder %s14, 0
    %p55 = por %p53, %p54
    %p56 = scmp.ne.s32.totalorder %s48, %s50
    %p57 = scmp.eq.s32.totalorder %s19, 1
    %p58 = por %p56, %p57
    %p59 = scmp.ne.s32.totalorder %s50, %s51
    %p60 = scmp.eq.s32.totalorder %s19, 0
    %p61 = por %p59, %p60
    %p62 = scmp.ne.s32.totalorder %s50, %s51
    %p63 = scmp.eq.s32.totalorder %s20, 1
    %p64 = por %p62, %p63
    %p66 = scmp.ne.s32.totalorder %s51, %s65
    %p67 = scmp.eq.s32.totalorder %s20, 0
    %p68 = por %p66, %p67
    %s70 = sadd.s32 %s69, 1
    %p73 = scmp.eq.s32.totalorder %s14, 1
    %p74 = scmp.ne.s32.totalorder %s69, %s71
    %p75 = scmp.eq.s32.totalorder %s14, 0
    %p76 = por %p74, %p75
    %p77 = scmp.ne.s32.totalorder %s69, %s71
    %p78 = scmp.eq.s32.totalorder %s19, 1
    %p79 = por %p77, %p78
    %p80 = scmp.ne.s32.totalorder %s71, %s72
    %p81 = scmp.eq.s32.totalorder %s19, 0
    %p82 = por %p80, %p81
    %p83 = scmp.ne.s32.totalorder %s71, %s72
    %p84 = scmp.eq.s32.totalorder %s20, 1
    %p85 = por %p83, %p84
    %p87 = scmp.ne.s32.totalorder %s72, %s86
    %p88 = scmp.eq.s32.totalorder %s20, 0
    %p89 = por %p87, %p88
    %s91 = sadd.s32 %s90, 1
    %p94 = scmp.eq.s32.totalorder %s14, 1
    %p95 = scmp.ne.s32.totalorder %s90, %s92
    %p96 = scmp.eq.s32.totalorder %s14, 0
    %p97 = por %p95, %p96
    %p98 = scmp.ne.s32.totalorder %s90, %s92
    %p99 = scmp.eq.s32.totalorder %s19, 1
    %p100 = por %p98, %p99
    %p101 = scmp.ne.s32.totalorder %s92, %s93
    %p102 = scmp.eq.s32.totalorder %s19, 0
    %p103 = por %p101, %p102
    %p104 = scmp.ne.s32.totalorder %s92, %s93
    %p105 = scmp.eq.s32.totalorder %s20, 1
    %p106 = por %p104, %p105
    %p108 = scmp.ne.s32.totalorder %s93, %s107
    %p109 = scmp.eq.s32.totalorder %s20, 0
    %p110 = por %p108, %p109
    %s112 = sadd.s32 %s111, 1
    %p115 = scmp.eq.s32.totalorder %s14, 1
    %p116 = scmp.ne.s32.totalorder %s111, %s113
    %p117 = scmp.eq.s32.totalorder %s14, 0
    %p118 = por %p116, %p117
    %p119 = scmp.ne.s32.totalorder %s111, %s113
    %p120 = scmp.eq.s32.totalorder %s19, 1
    %p121 = por %p119, %p120
    %p122 = scmp.ne.s32.totalorder %s113, %s114
    %p123 = scmp.eq.s32.totalorder %s19, 0
    %p124 = por %p122, %p123
    %p125 = scmp.ne.s32.totalorder %s113, %s114
    %p126 = scmp.eq.s32.totalorder %s20, 1
    %p127 = por %p125, %p126
    %p129 = scmp.ne.s32.totalorder %s114, %s128
    %p130 = scmp.eq.s32.totalorder %s20, 0
    %p131 = por %p129, %p130
    %s133 = sadd.s32 %s132, 1
    %p136 = scmp.eq.s32.totalorder %s14, 1
    %p137 = scmp.ne.s32.totalorder %s132, %s134
    %p138 = scmp.eq.s32.totalorder %s14, 0
    %p139 = por %p137, %p138
    %p140 = scmp.ne.s32.totalorder %s132, %s134
    %p141 = scmp.eq.s32.totalorder %s19, 1
    %p142 = por %p140, %p141
    %p143 = scmp.ne.s32.totalorder %s134, %s135
    %p144 = scmp.eq.s32.totalorder %s19, 0
    %p145 = por %p143, %p144
    %p146 = scmp.ne.s32.totalorder %s134, %s135
    %p147 = scmp.eq.s32.totalorder %s20, 1
    %p148 = por %p146, %p147
    %p150 = scmp.ne.s32.totalorder %s135, %s149
    %p151 = scmp.eq.s32.totalorder %s20, 0
    %p152 = por %p150, %p151
    %s154 = sadd.s32 %s153, 1
    %p157 = scmp.eq.s32.totalorder %s14, 1
    %p158 = scmp.ne.s32.totalorder %s153, %s155
    %p159 = scmp.eq.s32.totalorder %s14, 0
    %p160 = por %p158, %p159
    %p161 = scmp.ne.s32.totalorder %s153, %s155
    %p162 = scmp.eq.s32.totalorder %s19, 1
    %p163 = por %p161, %p162
    %p164 = scmp.ne.s32.totalorder %s155, %s156
    %p165 = scmp.eq.s32.totalorder %s19, 0
    %p166 = por %p164, %p165
    %p167 = scmp.ne.s32.totalorder %s155, %s156
    %p168 = scmp.eq.s32.totalorder %s20, 1
    %p169 = por %p167, %p168
    %p171 = scmp.ne.s32.totalorder %s156, %s170
    %p172 = scmp.eq.s32.totalorder %s20, 0
    %p173 = por %p171, %p172
    %s175 = sadd.s32 %s174, 1
    %p178 = scmp.eq.s32.totalorder %s14, 1
    %p179 = scmp.ne.s32.totalorder %s174, %s176
    %p180 = scmp.eq.s32.totalorder %s14, 0
    %p181 = por %p179, %p180
    %p182 = scmp.ne.s32.totalorder %s174, %s176
    %p183 = scmp.eq.s32.totalorder %s19, 1
    %p184 = por %p182, %p183
    %p185 = scmp.ne.s32.totalorder %s176, %s177
    %p186 = scmp.eq.s32.totalorder %s19, 0
    %p187 = por %p185, %p186
    %p188 = scmp.ne.s32.totalorder %s176, %s177
    %p189 = scmp.eq.s32.totalorder %s20, 1
    %p190 = por %p188, %p189
    %p192 = scmp.ne.s32.totalorder %s177, %s191
    %p193 = scmp.eq.s32.totalorder %s20, 0
    %p194 = por %p192, %p193
    %s195 = ssub.s32 %s14, %s21
    %p196 = scmp.eq.s32.totalorder %s195, 0
    %s198 = sadd.s32 %s197, 1
    %s199 = scalar_select %p196, %s197, %s198
    %p202 = pneg %p196
    %p203 = scmp.eq.s32.totalorder %s14, 1
    %p204 = por %p202, %p203
    %p205 = scmp.ne.s32.totalorder %s197, %s200
    %p206 = scmp.eq.s32.totalorder %s14, 0
    %p207 = por %p205, %p206
    %p208 = scmp.ne.s32.totalorder %s197, %s200
    %p209 = scmp.eq.s32.totalorder %s19, 1
    %p210 = por %p208, %p209
    %p211 = scmp.ne.s32.totalorder %s200, %s201
    %p212 = scmp.eq.s32.totalorder %s19, 0
    %p213 = por %p211, %p212
    %p214 = scmp.ne.s32.totalorder %s200, %s201
    %p215 = scmp.eq.s32.totalorder %s20, 1
    %p216 = por %p214, %p215
    %p218 = scmp.ne.s32.totalorder %s201, %s217
    %p219 = scmp.eq.s32.totalorder %s20, 0
    %p220 = por %p218, %p219
    %p221 = scmp.le.s32.totalorder 1, %s14
    %p222 = scmp.lt.s32.totalorder %s14, 3
    %p223 = pnand %p221, %p222
    %p224 = pneg %p223
    // Predicated region
    $region9: #{cat_htiht_forward.1} parent=5 // pred_check
      _
    $region10: #{cat_htiht_forward.1} parent=5 // pred_check_branch
      %226 = sbr.rel (%p223) target = $region12
    $region11: #{cat_htiht_forward.1} parent=5 // pred_region
      %s227 = ssub.s32 %s14, 1
      // Predicated region
      $region13: #{cat_htiht_forward.1} parent=11 // pred_check
        %p228 = pneg %p61
      $region14: #{cat_htiht_forward.1} parent=11 // pred_check_branch
        %230 = sbr.rel (%p228) target = $region16
      $region15: #{cat_htiht_forward.1} parent=11 // pred_region
        _
      $region16: #{cat_htiht_forward.1} parent=11 // pred_fallthru
        _
      // Predicated region
      $region17: #{cat_htiht_forward.1} parent=11 // pred_check
        %p231 = pneg %p82
      $region18: #{cat_htiht_forward.1} parent=11 // pred_check_branch
        %233 = sbr.rel (%p231) target = $region20
      $region19: #{cat_htiht_forward.1} parent=11 // pred_region
        _
      $region20: #{cat_htiht_forward.1} parent=11 // pred_fallthru
        _
      // Predicated region
      $region21: #{cat_htiht_forward.1} parent=11 // pred_check
        %p234 = pneg %p103
      $region22: #{cat_htiht_forward.1} parent=11 // pred_check_branch
        %236 = sbr.rel (%p234) target = $region24
      $region23: #{cat_htiht_forward.1} parent=11 // pred_region
        _
      $region24: #{cat_htiht_forward.1} parent=11 // pred_fallthru
        _
      // Predicated region
      $region25: #{cat_htiht_forward.1} parent=11 // pred_check
        %p237 = pneg %p124
      $region26: #{cat_htiht_forward.1} parent=11 // pred_check_branch
        %239 = sbr.rel (%p237) target = $region28
      $region27: #{cat_htiht_forward.1} parent=11 // pred_region
        _
      $region28: #{cat_htiht_forward.1} parent=11 // pred_fallthru
        _
      // Predicated region
      $region29: #{cat_htiht_forward.1} parent=11 // pred_check
        %p240 = pneg %p145
      $region30: #{cat_htiht_forward.1} parent=11 // pred_check_branch
        %242 = sbr.rel (%p240) target = $region32
      $region31: #{cat_htiht_forward.1} parent=11 // pred_region
        _
      $region32: #{cat_htiht_forward.1} parent=11 // pred_fallthru
        _
      // Predicated region
      $region33: #{cat_htiht_forward.1} parent=11 // pred_check
        %p243 = pneg %p166
      $region34: #{cat_htiht_forward.1} parent=11 // pred_check_branch
        %245 = sbr.rel (%p243) target = $region36
      $region35: #{cat_htiht_forward.1} parent=11 // pred_region
        _
      $region36: #{cat_htiht_forward.1} parent=11 // pred_fallthru
        _
      // Predicated region
      $region37: #{cat_htiht_forward.1} parent=11 // pred_check
        %p246 = pneg %p187
      $region38: #{cat_htiht_forward.1} parent=11 // pred_check_branch
        %248 = sbr.rel (%p246) target = $region40
      $region39: #{cat_htiht_forward.1} parent=11 // pred_region
        _
      $region40: #{cat_htiht_forward.1} parent=11 // pred_fallthru
        _
    $region12: #{cat_htiht_forward.1} parent=5 // pred_fallthru
      _
    %p249 = scmp.lt.s32.totalorder %s14, 2
    // Predicated region
    $region41: #{cat_htiht_forward.1} parent=5 // pred_check
      %p250 = pneg %p249
    $region42: #{cat_htiht_forward.1} parent=5 // pred_check_branch
      %252 = sbr.rel (%p250) target = $region44
    $region43: #{cat_htiht_forward.1} parent=5 // pred_region
      // Predicated region
      $region45: #{cat_htiht_forward.1} parent=43 // pred_check
        %p253 = pneg %p34
      $region46: #{cat_htiht_forward.1} parent=43 // pred_check_branch
        %255 = sbr.rel (%p253) target = $region48
      $region47: #{cat_htiht_forward.1} parent=43 // pred_region
        %p256 = scmp.lt.s32.totalorder %s14, 1
        %s257 = scalar_select %p256, %s14, 1
        %s258 = smul.addr %s257, 2
        %s259 = smul.addr %s258, 4
        %s260 = scalar_lea.vmem %s0, %s259
      $region48: #{cat_htiht_forward.1} parent=43 // pred_fallthru
        _
    $region44: #{cat_htiht_forward.1} parent=5 // pred_fallthru
      _
    %p261 = scmp.le.s32.totalorder 1, %s14
    %p262 = scmp.lt.s32.totalorder %s14, 3
    %p263 = pnand %p261, %p262
    %p264 = pneg %p263
    // Predicated region
    $region49: #{cat_htiht_forward.1} parent=5 // pred_check
      _
    $region50: #{cat_htiht_forward.1} parent=5 // pred_check_branch
      %266 = sbr.rel (%p263) target = $region52
    $region51: #{cat_htiht_forward.1} parent=5 // pred_region
      %s267 = ssub.s32 %s14, 1
      %p268 = scmp.lt.s32.totalorder %s19, 1
      %s269 = scalar_select %p268, %s19, 1
      %s270 = smul.addr %s269, 2
      %s271 = smul.addr %s270, 4
      %s272 = scalar_lea.vmem %s0, %s271
      %p273 = pneg %p40
      %p274 = pneg %p37
      %p275 = pneg %p61
      %p276 = pneg %p58
      %p277 = pneg %p82
      %p278 = pneg %p79
      %p279 = pneg %p103
      %p280 = pneg %p100
      %p281 = pneg %p124
      %p282 = pneg %p121
      %p283 = pneg %p145
      %p284 = pneg %p142
      %p285 = pneg %p166
      %p286 = pneg %p163
      %p287 = pneg %p187
      %p288 = pneg %p184
      %p289 = pneg %p213
      %p290 = pneg %p210
      %p291 = scmp.lt.s32.totalorder %s19, 1
      %s292 = scalar_select %p291, %s19, 1
      %s293 = smul.addr %s292, 2
      %s294 = smul.addr %s293, 4
      %s295 = scalar_lea.vmem %s8, %s294
      %p296 = scmp.lt.s32.totalorder %s19, 1
      %s297 = scalar_select %p296, %s19, 1
      %s298 = smul.addr %s297, 2
      %s299 = smul.addr %s298, 4
      %s300 = scalar_lea.vmem %s0, %s299
      %p301 = scmp.lt.s32.totalorder %s19, 1
      %s302 = scalar_select %p301, %s19, 1
      %s303 = smul.addr %s302, 2
      %s304 = smul.addr %s303, 4
      %s305 = scalar_lea.vmem %s8, %s304
      %vm307 = vcmask 519168
      %308 = vst.msk [vmem:[#allocation2] sm:$0xf] %vm307, 0.0
      %309 = vst.msk [vmem:[#allocation2 + $0x8] sm:$0xf] %vm307, 0.0
      %vm310 = vcmask 134144
      %311 = vst.msk [vmem:[#allocation3] sm:$0xf] %vm310, 0.0
      %vm312 = vcmask 798344
      %313 = vst.msk [vmem:[#allocation3 + $0x4] sm:$0xf] %vm312, 0.0
      %314 = vst.msk [vmem:[#allocation4] sm:$0xf] %vm310, 0.0
      %315 = vst.msk [vmem:[#allocation4 + $0x4] sm:$0xf] %vm312, 0.0
      %vm316 = vcmask 138240
      %317 = vst.msk [vmem:[#allocation5] sm:$0xff] %vm316, 0.0
      %vm318 = vcmask 277640
      %319 = vst.msk [vmem:[#allocation5 + $0x10] sm:$0xff] %vm318, 0.0
      %320 = vst.msk [vmem:[#allocation6] sm:$0xff] %vm316, 0.0
      %321 = vst.msk [vmem:[#allocation6 + $0x18] sm:$0xff] %vm316, 0.0
      %322 = vst.msk [vmem:[#allocation6 + $0x10] sm:$0xff] %vm318, 0.0
      %323 = vst.msk [vmem:[#allocation6 + $0x28] sm:$0xff] %vm318, 0.0
      %v324 = vld [vmem:[%s3] sm:$0xf]
      %v325 = vlaneseq
      %v326 = vand.u32 %v325, 127
      %v327 = vadd.s32 %v326, 128
      %vm328 = vcmp.lt.s32.totalorder %v326, 0
      %v329 = vsub.s32 0, %v326
      %v330 = vsel %vm328, %v329, %v326
      %v331 = vshrl.u32 %v330, 4
      %v332 = vand.u32 %v330, 15
      %v333 = vsub.s32 0, %v332
      %v334 = vsel %vm328, %v333, %v332
      %vm335 = vcmp.lt.s32.totalorder %v327, 0
      %v336 = vsub.s32 0, %v327
      %v337 = vsel %vm335, %v336, %v327
      %v338 = vshrl.u32 %v337, 4
      %v339 = vand.u32 %v337, 15
      %v340 = vsub.s32 0, %v339
      %v341 = vsel %vm335, %v340, %v339
      %vm342 = vcmp.ne.s32.totalorder %v334, 0
      %vm343 = vcmp.ne.s32.totalorder %v341, 0
      %vm344 = vcmp.lt.s32.totalorder %v334, 0
      %vm345 = vcmp.lt.s32.totalorder %v341, 0
      %vm346 = vmand %vm344, %vm342
      %vm347 = vmand %vm345, %vm343
      %v348 = vadd.s32 %v334, 16
      %v349 = vadd.s32 %v341, 16
      %v350 = vsel %vm346, %v348, %v334
      %v351 = vsel %vm347, %v349, %v341
      %vm352 = vcmp.ne.s32.totalorder %v350, 0
      %vm353 = vcmp.ne.s32.totalorder %v351, 0
      %vm354 = vcmp.ne.s32.totalorder %v350, 15
      %vm355 = vcmp.ne.s32.totalorder %v351, 15
      %v356 = vld [vmem:[%s300] sm:$0xff]
      %358 = vset.pattern.permute.xlu0 10
      %359 = vperm.xlu0 %358, %v324
      %v360 = vpop.permute.xlu0 %359
      %v362 = vunpack.c.l.s4 839922192
      %v363 = vunpack.c.0.s8 %v362
      %v364 = vperm.slane %v360, %v363
      %v366 = vmul.f32 %v356, %v364
      %367 = vset.pattern.permute.xlu0 11
      %368 = vperm.xlu0 %367, %v324
      %v369 = vpop.permute.xlu0 %368
      %v371 = vunpack.c.l.s4 839922192
      %v372 = vunpack.c.0.s8 %v371
      %v373 = vperm.slane %v369, %v372
      %v375 = vadd.f32 %v366, %v373
      %v376 = vmax.f32 %v375, 0.0
      %378 = vst [vmem:[#allocation1] ss:$2 sm:$0xff] %v376
      %v379 = vld.sshfl [vmem:[#allocation1] sm:$0xff pattern:$0x75316420]
      %v380 = vld.sshfl [vmem:[#allocation1 + $0x8] sm:$0xff pattern:$0x75316420]
      %381 = vrot.lane.b32.xlu0 %v379, 17
      %v382 = vpop.permute.xlu0 %381
      %383 = vrot.lane.b32.xlu0 %v380, 17
      %v384 = vpop.permute.xlu0 %383
      %v385 = vsel %vm316, %v382, %v384
      %vm389 = vcmask 1043592
      %390 = vst.msk [vmem:[#allocation5] sm:$0xf] %vm389, %v382
      %391 = vst [vmem:[#allocation5 + $0x8] sm:$0xf] %v385
      %392 = vst.msk [vmem:[#allocation5 + $0x10] sm:$0xf] %vm310, %v384
      %393 = vst [vmem:[#allocation1] ss:$2 sm:$0xff] %v376
      %v394 = vld.sshfl [vmem:[#allocation1] sm:$0xff pattern:$0x75316420]
      %v395 = vld.sshfl [vmem:[#allocation1 + $0x8] sm:$0xff pattern:$0x75316420]
      %v398 = vpack.c.bf16 %v394, %v394
      %v399 = vpack.c.bf16 %v395, %v395
      %v400 = vld [vmem:[%s1] sm:$0xff]
      %v401 = vld [vmem:[%s1 + $0x8] sm:$0xff]
      %v402 = vld [vmem:[%s1 + $0x10] sm:$0xff]
      %v403 = vld [vmem:[%s1 + $0x18] sm:$0xff]
      %v404 = vld [vmem:[%s1 + $0x20] sm:$0xff]
      %v405 = vld [vmem:[%s1 + $0x28] sm:$0xff]
      %v406 = vld [vmem:[%s1 + $0x30] sm:$0xff]
      %v407 = vld [vmem:[%s1 + $0x38] sm:$0xff]
      %v408 = vld [vmem:[%s1 + $0x40] sm:$0xff]
      %v409 = vld [vmem:[%s1 + $0x48] sm:$0xff]
      %v410 = vld [vmem:[%s1 + $0x50] sm:$0xff]
      %v411 = vld [vmem:[%s1 + $0x58] sm:$0xff]
      %v412 = vld [vmem:[%s1 + $0x60] sm:$0xff]
      %v413 = vld [vmem:[%s1 + $0x68] sm:$0xff]
      %v414 = vld [vmem:[%s1 + $0x70] sm:$0xff]
      %v415 = vld [vmem:[%s1 + $0x78] sm:$0xff]
      %v416 = vld [vmem:[%s1 + $0x80] sm:$0xff]
      %v417 = vld [vmem:[%s1 + $0x88] sm:$0xff]
      %v418 = vld [vmem:[%s1 + $0x90] sm:$0xff]
      %v419 = vld [vmem:[%s1 + $0x98] sm:$0xff]
      %v420 = vld [vmem:[%s1 + $0xa0] sm:$0xff]
      %v421 = vld [vmem:[%s1 + $0xa8] sm:$0xff]
      %v422 = vld [vmem:[%s1 + $0xb0] sm:$0xff]
      %v423 = vld [vmem:[%s1 + $0xb8] sm:$0xff]
      %v424 = vld [vmem:[%s1 + $0xc0] sm:$0xff]
      %v425 = vld [vmem:[%s1 + $0xc8] sm:$0xff]
      %v426 = vld [vmem:[%s1 + $0xd0] sm:$0xff]
      %v427 = vld [vmem:[%s1 + $0xd8] sm:$0xff]
      %v428 = vld [vmem:[%s1 + $0xe0] sm:$0xff]
      %v429 = vld [vmem:[%s1 + $0xe8] sm:$0xff]
      %v430 = vld [vmem:[%s1 + $0xf0] sm:$0xff]
      %v431 = vld [vmem:[%s1 + $0xf8] sm:$0xff]
      %v464 = vunpack.c.l.b16 %v400
      %v465 = vunpack.c.h.b16 %v400
      %v466 = vunpack.c.l.b16 %v401
      %v467 = vunpack.c.h.b16 %v401
      %v468 = vunpack.c.l.b16 %v402
      %v469 = vunpack.c.h.b16 %v402
      %v470 = vunpack.c.l.b16 %v403
      %v471 = vunpack.c.h.b16 %v403
      %v472 = vunpack.c.l.b16 %v404
      %v473 = vunpack.c.h.b16 %v404
      %v474 = vunpack.c.l.b16 %v405
      %v475 = vunpack.c.h.b16 %v405
      %v476 = vunpack.c.l.b16 %v406
      %v477 = vunpack.c.h.b16 %v406
      %v478 = vunpack.c.l.b16 %v407
      %v479 = vunpack.c.h.b16 %v407
      %v480 = vunpack.c.l.b16 %v408
      %v481 = vunpack.c.h.b16 %v408
      %v482 = vunpack.c.l.b16 %v409
      %v483 = vunpack.c.h.b16 %v409
      %v484 = vunpack.c.l.b16 %v410
      %v485 = vunpack.c.h.b16 %v410
      %v486 = vunpack.c.l.b16 %v411
      %v487 = vunpack.c.h.b16 %v411
      %v488 = vunpack.c.l.b16 %v412
      %v489 = vunpack.c.h.b16 %v412
      %v490 = vunpack.c.l.b16 %v413
      %v491 = vunpack.c.h.b16 %v413
      %v492 = vunpack.c.l.b16 %v414
      %v493 = vunpack.c.h.b16 %v414
      %v494 = vunpack.c.l.b16 %v415
      %v495 = vunpack.c.h.b16 %v415
      %v496 = vunpack.c.l.b16 %v416
      %v497 = vunpack.c.h.b16 %v416
      %v498 = vunpack.c.l.b16 %v417
      %v499 = vunpack.c.h.b16 %v417
      %v500 = vunpack.c.l.b16 %v418
      %v501 = vunpack.c.h.b16 %v418
      %v502 = vunpack.c.l.b16 %v419
      %v503 = vunpack.c.h.b16 %v419
      %v504 = vunpack.c.l.b16 %v420
      %v505 = vunpack.c.h.b16 %v420
      %v506 = vunpack.c.l.b16 %v421
      %v507 = vunpack.c.h.b16 %v421
      %v508 = vunpack.c.l.b16 %v422
      %v509 = vunpack.c.h.b16 %v422
      %v510 = vunpack.c.l.b16 %v423
      %v511 = vunpack.c.h.b16 %v423
      %v512 = vunpack.c.l.b16 %v424
      %v513 = vunpack.c.h.b16 %v424
      %v514 = vunpack.c.l.b16 %v425
      %v515 = vunpack.c.h.b16 %v425
      %v516 = vunpack.c.l.b16 %v426
      %v517 = vunpack.c.h.b16 %v426
      %v518 = vunpack.c.l.b16 %v427
      %v519 = vunpack.c.h.b16 %v427
      %v520 = vunpack.c.l.b16 %v428
      %v521 = vunpack.c.h.b16 %v428
      %v522 = vunpack.c.l.b16 %v429
      %v523 = vunpack.c.h.b16 %v429
      %v524 = vunpack.c.l.b16 %v430
      %v525 = vunpack.c.h.b16 %v430
      %v526 = vunpack.c.l.b16 %v431
      %v527 = vunpack.c.h.b16 %v431
      %v528 = vpack.c.b16 %v466, %v464
      %v529 = vpack.c.b16 %v467, %v465
      %v530 = vpack.c.b16 %v470, %v468
      %v531 = vpack.c.b16 %v471, %v469
      %v532 = vpack.c.b16 %v474, %v472
      %v533 = vpack.c.b16 %v475, %v473
      %v534 = vpack.c.b16 %v478, %v476
      %v535 = vpack.c.b16 %v479, %v477
      %v536 = vpack.c.b16 %v482, %v480
      %v537 = vpack.c.b16 %v483, %v481
      %v538 = vpack.c.b16 %v486, %v484
      %v539 = vpack.c.b16 %v487, %v485
      %v540 = vpack.c.b16 %v490, %v488
      %v541 = vpack.c.b16 %v491, %v489
      %v542 = vpack.c.b16 %v494, %v492
      %v543 = vpack.c.b16 %v495, %v493
      %v544 = vpack.c.b16 %v498, %v496
      %v545 = vpack.c.b16 %v499, %v497
      %v546 = vpack.c.b16 %v502, %v500
      %v547 = vpack.c.b16 %v503, %v501
      %v548 = vpack.c.b16 %v506, %v504
      %v549 = vpack.c.b16 %v507, %v505
      %v550 = vpack.c.b16 %v510, %v508
      %v551 = vpack.c.b16 %v511, %v509
      %v552 = vpack.c.b16 %v514, %v512
      %v553 = vpack.c.b16 %v515, %v513
      %v554 = vpack.c.b16 %v518, %v516
      %v555 = vpack.c.b16 %v519, %v517
      %v556 = vpack.c.b16 %v522, %v520
      %v557 = vpack.c.b16 %v523, %v521
      %v558 = vpack.c.b16 %v526, %v524
      %v559 = vpack.c.b16 %v527, %v525
      %592 = vmatpush.bf16.msra.mxu0 %v542
      %593 = vmatpush.bf16.msra.mxu0 %v540
      %594 = vmatpush.bf16.msra.mxu0 %v538
      %595 = vmatpush.bf16.msra.mxu0 %v536
      %596 = vmatpush.bf16.msra.mxu0 %v534
      %597 = vmatpush.bf16.msra.mxu0 %v532
      %598 = vmatpush.bf16.msra.mxu0 %v530
      %599 = vmatpush.bf16.msra.mxu0 %v528
      %600 = vmatmul.bf16.gmra.mxu0 %v398
      %v601 = vpop.f32.mrf.mxu0
      %v602 = vadd.f32 0.0, %v601
      %v603 = vpop.f32.mrf.mxu0
      %604 = vdwg.mxu0
      %605 = vmatpush.bf16.msra.mxu0 %v558
      %606 = vmatpush.bf16.msra.mxu0 %v556
      %607 = vmatpush.bf16.msra.mxu0 %v554
      %608 = vmatpush.bf16.msra.mxu0 %v552
      %609 = vmatpush.bf16.msra.mxu0 %v550
      %610 = vmatpush.bf16.msra.mxu0 %v548
      %611 = vmatpush.bf16.msra.mxu0 %v546
      %612 = vmatpush.bf16.msra.mxu0 %v544
      %613 = vmatmul.bf16.gmra.mxu0 %v399
      %v614 = vpop.f32.mrf.mxu0
      %v615 = vadd.f32 %v602, %v614
      %v616 = vpop.f32.mrf.mxu0
      %617 = vdwg.mxu0
      %618 = vmatpush.bf16.msra.mxu0 %v543
      %619 = vmatpush.bf16.msra.mxu0 %v541
      %620 = vmatpush.bf16.msra.mxu0 %v539
      %621 = vmatpush.bf16.msra.mxu0 %v537
      %622 = vmatpush.bf16.msra.mxu0 %v535
      %623 = vmatpush.bf16.msra.mxu0 %v533
      %624 = vmatpush.bf16.msra.mxu0 %v531
      %625 = vmatpush.bf16.msra.mxu0 %v529
      %626 = vmatmul.bf16.gmra.mxu0 %v398
      %v627 = vpop.f32.mrf.mxu0
      %v628 = vadd.f32 0.0, %v627
      %v629 = vpop.f32.mrf.mxu0
      %630 = vdwg.mxu0
      %631 = vmatpush.bf16.msra.mxu0 %v559
      %632 = vmatpush.bf16.msra.mxu0 %v557
      %633 = vmatpush.bf16.msra.mxu0 %v555
      %634 = vmatpush.bf16.msra.mxu0 %v553
      %635 = vmatpush.bf16.msra.mxu0 %v551
      %636 = vmatpush.bf16.msra.mxu0 %v549
      %637 = vmatpush.bf16.msra.mxu0 %v547
      %638 = vmatpush.bf16.msra.mxu0 %v545
      %639 = vmatmul.bf16.gmra.mxu0 %v399
      %v640 = vpop.f32.mrf.mxu0
      %v641 = vadd.f32 %v628, %v640
      %v642 = vpop.f32.mrf.mxu0
      %643 = vdwg.mxu0
      %v646 = vrot.slane %v641, 4
      %vm647 = vcmask 1043456
      %v648 = vsel %vm647, %v615, %v646
      %649 = vrot.lane.b32.xlu0 %v648, 64
      %v650 = vpop.permute.xlu0 %649
      %v651 = vrot.slane %v650, 4
      %vm652 = vcmask 523264
      %v653 = vsel %vm652, %v651, %v650
      %vm655 = vcmask 1043968
      %vm656 = vcmask 1047556
      %vm657 = vmor %vm656, %vm655
      %658 = vst.msk [vmem:[#allocation2] sm:$0xff] %vm657, %v653
      %v659 = vld [vmem:[#allocation2] sm:$0xff]
      %v660 = vld [vmem:[#allocation2 + $0x8] sm:$0xf]
      %661 = vset.pattern.permute.xlu0 0
      %662 = vperm.xlu0 %661, %v324
      %v663 = vpop.permute.xlu0 %662
      %666 = vst [vmem:[#allocation1] ss:$2 sm:$0xff] %v659
      %v667 = vld.sshfl [vmem:[#allocation1] sm:$0xff pattern:$0x75316420]
      %v668 = vld.sshfl [vmem:[#allocation1 + $0x8] sm:$0xff pattern:$0x75316420]
      %v671 = vmul.f32 %v663, %v667
      %v672 = vmul.f32 %v663, %v668
      %v673 = vadd.f32 %v671, 0.0
      %v674 = vadd.f32 %v672, 0.0
      %675 = vset.pattern.permute.xlu0 1
      %676 = vperm.xlu0 %675, %v324
      %v677 = vpop.permute.xlu0 %676
      %679 = vst [vmem:[#allocation1] ss:$2 sm:$0xff] %v659
      %v680 = vld.sshfl [vmem:[#allocation1] sm:$0xff pattern:$0x75316420]
      %v681 = vld.sshfl [vmem:[#allocation1 + $0x8] sm:$0xff pattern:$0x75316420]
      %682 = vrot.lane.b32.xlu0 %v680, 112
      %v683 = vpop.permute.xlu0 %682
      %684 = vrot.lane.b32.xlu0 %v681, 112
      %v685 = vpop.permute.xlu0 %684
      %vm686 = vcmask 916480
      %v687 = vsel %vm686, %v683, %v685
      %v690 = vmul.f32 %v677, %v687
      %v691 = vmul.f32 %v677, %v685
      %v692 = vadd.f32 %v673, %v690
      %v693 = vadd.f32 %v674, %v691
      %694 = vset.pattern.permute.xlu0 2
      %695 = vperm.xlu0 %694, %v324
      %v696 = vpop.permute.xlu0 %695
      %698 = vst [vmem:[#allocation1] ss:$2 sm:$0xff] %v659
      %v699 = vld.sshfl [vmem:[#allocation1] sm:$0xff pattern:$0x75316420]
      %v700 = vld.sshfl [vmem:[#allocation1 + $0x8] sm:$0xff pattern:$0x75316420]
      %701 = vrot.lane.b32.xlu0 %v699, 96
      %v702 = vpop.permute.xlu0 %701
      %703 = vrot.lane.b32.xlu0 %v700, 96
      %v704 = vpop.permute.xlu0 %703
      %vm705 = vcmask 785408
      %v706 = vsel %vm705, %v702, %v704
      %v709 = vmul.f32 %v696, %v706
      %v710 = vmul.f32 %v696, %v704
      %v711 = vadd.f32 %v692, %v709
      %v712 = vadd.f32 %v693, %v710
      %713 = vset.pattern.permute.xlu0 3
      %714 = vperm.xlu0 %713, %v324
      %v715 = vpop.permute.xlu0 %714
      %717 = vst [vmem:[#allocation1] ss:$2 sm:$0xff] %v659
      %v718 = vld.sshfl [vmem:[#allocation1] sm:$0xff pattern:$0x75316420]
      %v719 = vld.sshfl [vmem:[#allocation1 + $0x8] sm:$0xff pattern:$0x75316420]
      %720 = vrot.lane.b32.xlu0 %v718, 80
      %v721 = vpop.permute.xlu0 %720
      %722 = vrot.lane.b32.xlu0 %v719, 80
      %v723 = vpop.permute.xlu0 %722
      %vm724 = vcmask 654336
      %v725 = vsel %vm724, %v721, %v723
      %v728 = vmul.f32 %v715, %v725
      %v729 = vmul.f32 %v715, %v723
      %v730 = vadd.f32 %v711, %v728
      %v731 = vadd.f32 %v712, %v729
      %732 = vset.pattern.permute.xlu0 4
      %733 = vperm.xlu0 %732, %v324
      %v734 = vpop.permute.xlu0 %733
      %736 = vst [vmem:[#allocation1] ss:$2 sm:$0xff] %v659
      %v737 = vld.sshfl [vmem:[#allocation1] sm:$0xff pattern:$0x75316420]
      %v738 = vld.sshfl [vmem:[#allocation1 + $0x8] sm:$0xff pattern:$0x75316420]
      %739 = vrot.lane.b32.xlu0 %v737, 64
      %v740 = vpop.permute.xlu0 %739
      %741 = vrot.lane.b32.xlu0 %v738, 64
      %v742 = vpop.permute.xlu0 %741
      %v743 = vsel %vm652, %v740, %v742
      %v746 = vmul.f32 %v734, %v743
      %v747 = vmul.f32 %v734, %v742
      %v748 = vadd.f32 %v730, %v746
      %v749 = vadd.f32 %v731, %v747
      %750 = vset.pattern.permute.xlu0 5
      %751 = vperm.xlu0 %750, %v324
      %v752 = vpop.permute.xlu0 %751
      %755 = vst [vmem:[#allocation1] ss:$2 sm:$0xff] %v659
      %s756 = scalar_lea.vmem [#allocation1], 16
      %757 = vst [vmem:[%s756] ss:$2 sm:$0xff] %v660
      %v758 = vld.sshfl [vmem:[#allocation1] sm:$0xff pattern:$0x75316420]
      %v759 = vld.sshfl [vmem:[#allocation1 + $0x8] sm:$0xff pattern:$0x75316420]
      %v760 = vld.sshfl [vmem:[#allocation1 + $0x10] sm:$0xff pattern:$0x75316420]
      %761 = vrot.lane.b32.xlu0 %v758, 48
      %v762 = vpop.permute.xlu0 %761
      %763 = vrot.lane.b32.xlu0 %v759, 48
      %v764 = vpop.permute.xlu0 %763
      %765 = vrot.lane.b32.xlu0 %v760, 48
      %v766 = vpop.permute.xlu0 %765
      %vm767 = vcmask 392192
      %v768 = vsel %vm767, %v762, %v764
      %v769 = vsel %vm767, %v764, %v766
      %v772 = vmul.f32 %v752, %v768
      %v773 = vmul.f32 %v752, %v769
      %v774 = vadd.f32 %v748, %v772
      %v775 = vadd.f32 %v749, %v773
      %776 = vset.pattern.permute.xlu0 6
      %777 = vperm.xlu0 %776, %v324
      %v778 = vpop.permute.xlu0 %777
      %780 = vst [vmem:[#allocation1] ss:$2 sm:$0xff] %v659
      %s781 = scalar_lea.vmem [#allocation1], 16
      %782 = vst [vmem:[%s781] ss:$2 sm:$0xff] %v660
      %v783 = vld.sshfl [vmem:[#allocation1] sm:$0xff pattern:$0x75316420]
      %v784 = vld.sshfl [vmem:[#allocation1 + $0x8] sm:$0xff pattern:$0x75316420]
      %v785 = vld.sshfl [vmem:[#allocation1 + $0x10] sm:$0xff pattern:$0x75316420]
      %786 = vrot.lane.b32.xlu0 %v783, 32
      %v787 = vpop.permute.xlu0 %786
      %788 = vrot.lane.b32.xlu0 %v784, 32
      %v789 = vpop.permute.xlu0 %788
      %790 = vrot.lane.b32.xlu0 %v785, 32
      %v791 = vpop.permute.xlu0 %790
      %vm792 = vcmask 261120
      %v793 = vsel %vm792, %v787, %v789
      %v794 = vsel %vm792, %v789, %v791
      %v797 = vmul.f32 %v778, %v793
      %v798 = vmul.f32 %v778, %v794
      %v799 = vadd.f32 %v774, %v797
      %v800 = vadd.f32 %v775, %v798
      %801 = vset.pattern.permute.xlu0 7
      %802 = vperm.xlu0 %801, %v324
      %v803 = vpop.permute.xlu0 %802
      %805 = vst [vmem:[#allocation1] ss:$2 sm:$0xff] %v659
      %s806 = scalar_lea.vmem [#allocation1], 16
      %807 = vst [vmem:[%s806] ss:$2 sm:$0xff] %v660
      %v808 = vld.sshfl [vmem:[#allocation1] sm:$0xff pattern:$0x75316420]
      %v809 = vld.sshfl [vmem:[#allocation1 + $0x8] sm:$0xff pattern:$0x75316420]
      %v810 = vld.sshfl [vmem:[#allocation1 + $0x10] sm:$0xff pattern:$0x75316420]
      %811 = vrot.lane.b32.xlu0 %v808, 16
      %v812 = vpop.permute.xlu0 %811
      %813 = vrot.lane.b32.xlu0 %v809, 16
      %v814 = vpop.permute.xlu0 %813
      %815 = vrot.lane.b32.xlu0 %v810, 16
      %v816 = vpop.permute.xlu0 %815
      %vm817 = vcmask 130048
      %v818 = vsel %vm817, %v812, %v814
      %v819 = vsel %vm817, %v814, %v816
      %v822 = vmul.f32 %v803, %v818
      %v823 = vmul.f32 %v803, %v819
      %v824 = vadd.f32 %v799, %v822
      %v825 = vadd.f32 %v800, %v823
      %826 = vset.pattern.permute.xlu0 8
      %827 = vperm.xlu0 %826, %v324
      %v828 = vpop.permute.xlu0 %827
      %830 = vst [vmem:[#allocation1] ss:$2 sm:$0xff] %v659
      %s831 = scalar_lea.vmem [#allocation1], 16
      %832 = vst [vmem:[%s831] ss:$2 sm:$0xff] %v660
      %v833 = vld.sshfl [vmem:[#allocation1 + $0x8] sm:$0xff pattern:$0x75316420]
      %v834 = vld.sshfl [vmem:[#allocation1 + $0x10] sm:$0xff pattern:$0x75316420]
      %v837 = vmul.f32 %v828, %v833
      %v838 = vmul.f32 %v828, %v834
      %v839 = vadd.f32 %v824, %v837
      %v840 = vadd.f32 %v825, %v838
      %841 = vset.pattern.permute.xlu0 9
      %842 = vperm.xlu0 %841, %v324
      %v843 = vpop.permute.xlu0 %842
      %v845 = vadd.f32 %v839, %v843
      %v846 = vadd.f32 %v840, %v843
      %v847 = vmax.f32 %v845, 0.0
      %v848 = vmax.f32 %v846, 0.0
      %v851 = vrot.slane %v848, 4
      %v852 = vsel %vm647, %v847, %v851
      %853 = vrot.lane.b32.xlu0 %v852, 17
      %v854 = vpop.permute.xlu0 %853
      %v855 = vrot.slane %v854, 4
      %v856 = vsel %vm316, %v855, %v854
      %vm858 = vcmask 662532
      %vm859 = vmor %vm858, %vm389
      %860 = vst.msk [vmem:[#allocation3] sm:$0xff] %vm859, %v856
      %v861 = vld [vmem:[#allocation3] sm:$0xff]
      %v862 = vsel %vm352, 1, 0
      %v863 = vsel %vm353, 1, 0
      %vm864 = vcmp.eq.s32.totalorder %v862, 1
      %vm865 = vcmp.eq.s32.totalorder %v863, 1
      %867 = vst [vmem:[#allocation1] ss:$2 sm:$0xff] %v861
      %v868 = vld.sshfl [vmem:[#allocation1] sm:$0xff pattern:$0x75316420]
      %v869 = vld.sshfl [vmem:[#allocation1 + $0x8] sm:$0xff pattern:$0x75316420]
      %v872 = vsel %vm864, %v868, 0.0
      %v873 = vsel %vm865, %v869, 0.0
      %874 = vst [vmem:[#allocation7] sm:$0xf] %v872
      %875 = vst.msk [vmem:[#allocation7 + $0x8] sm:$0xf] %vm307, %v873
      %s876 = scalar_lea.vmem [#allocation1], 1
      %877 = vst [vmem:[%s876] ss:$2 sm:$0xff] %v861
      %v878 = vld.sshfl [vmem:[#allocation1] sm:$0xff pattern:$0x75316420]
      %v879 = vld.sshfl [vmem:[#allocation1 + $0x8] sm:$0xff pattern:$0x75316420]
      %880 = vrot.lane.b32.xlu0 %v878, 127
      %v881 = vpop.permute.xlu0 %880
      %882 = vrot.lane.b32.xlu0 %v879, 127
      %v883 = vpop.permute.xlu0 %882
      %vm884 = vcmask 1039360
      %v885 = vsel %vm884, %v881, %v883
      %888 = vst [vmem:[#allocation7] sm:$0xf0] %v885
      %vm889 = vcmask 523268
      %890 = vst.msk [vmem:[#allocation7 + $0x8] sm:$0xf0] %vm889, %v883
      %v891 = vsel %vm354, 1, 0
      %v892 = vsel %vm355, 1, 0
      %vm893 = vcmp.eq.s32.totalorder %v891, 1
      %vm894 = vcmp.eq.s32.totalorder %v892, 1
      %895 = vst [vmem:[#allocation1] ss:$2 sm:$0xff] %v861
      %v896 = vld.sshfl [vmem:[#allocation1] sm:$0xff pattern:$0x75316420]
      %v897 = vld.sshfl [vmem:[#allocation1 + $0x8] sm:$0xff pattern:$0x75316420]
      %898 = vrot.lane.b32.xlu0 %v896, 126
      %v899 = vpop.permute.xlu0 %898
      %900 = vrot.lane.b32.xlu0 %v897, 126
      %v901 = vpop.permute.xlu0 %900
      %vm902 = vcmask 1031168
      %v903 = vsel %vm902, %v899, %v901
      %v906 = vsel %vm893, %v903, 0.0
      %v907 = vsel %vm894, %v901, 0.0
      %908 = vst [vmem:[#allocation7 + $0x10] sm:$0xf] %v906
      %909 = vst.msk [vmem:[#allocation7 + $0x18] sm:$0xf] %vm307, %v907
      %910 = vst [vmem:[#allocation1] ss:$2 sm:$0xff] %v861
      %v911 = vld.sshfl [vmem:[#allocation1] sm:$0xff pattern:$0x75316420]
      %v912 = vld.sshfl [vmem:[#allocation1 + $0x8] sm:$0xff pattern:$0x75316420]
      %913 = vrot.lane.b32.xlu0 %v911, 112
      %v914 = vpop.permute.xlu0 %913
      %915 = vrot.lane.b32.xlu0 %v912, 112
      %v916 = vpop.permute.xlu0 %915
      %v917 = vsel %vm686, %v914, %v916
      %v920 = vsel %vm864, %v917, 0.0
      %v921 = vsel %vm865, %v916, 0.0
      %v924 = vrot.slane %v920, 4
      %v925 = vrot.slane %v921, 4
      %928 = vst [vmem:[#allocation7 + $0x10] sm:$0xf0] %v924
      %929 = vst.msk [vmem:[#allocation7 + $0x18] sm:$0xf0] %vm889, %v925
      %930 = vst [vmem:[#allocation1] ss:$2 sm:$0xff] %v861
      %v931 = vld.sshfl [vmem:[#allocation1] sm:$0xff pattern:$0x75316420]
      %v932 = vld.sshfl [vmem:[#allocation1 + $0x8] sm:$0xff pattern:$0x75316420]
      %933 = vrot.lane.b32.xlu0 %v931, 111
      %v934 = vpop.permute.xlu0 %933
      %935 = vrot.lane.b32.xlu0 %v932, 111
      %v936 = vpop.permute.xlu0 %935
      %vm937 = vcmask 908288
      %v938 = vsel %vm937, %v934, %v936
      %941 = vst [vmem:[#allocation7 + $0x20] sm:$0xf] %v938
      %942 = vst.msk [vmem:[#allocation7 + $0x28] sm:$0xf] %vm307, %v936
      %943 = vst [vmem:[#allocation1] ss:$2 sm:$0xff] %v861
      %v944 = vld.sshfl [vmem:[#allocation1] sm:$0xff pattern:$0x75316420]
      %v945 = vld.sshfl [vmem:[#allocation1 + $0x8] sm:$0xff pattern:$0x75316420]
      %946 = vrot.lane.b32.xlu0 %v944, 110
      %v947 = vpop.permute.xlu0 %946
      %948 = vrot.lane.b32.xlu0 %v945, 110
      %v949 = vpop.permute.xlu0 %948
      %vm950 = vcmask 900096
      %v951 = vsel %vm950, %v947, %v949
      %v954 = vsel %vm893, %v951, 0.0
      %v955 = vsel %vm894, %v949, 0.0
      %v958 = vrot.slane %v954, 4
      %v959 = vrot.slane %v955, 4
      %962 = vst [vmem:[#allocation7 + $0x20] sm:$0xf0] %v958
      %963 = vst.msk [vmem:[#allocation7 + $0x28] sm:$0xf0] %vm889, %v959
      %964 = vst [vmem:[#allocation1] ss:$2 sm:$0xff] %v861
      %v965 = vld.sshfl [vmem:[#allocation1] sm:$0xff pattern:$0x75316420]
      %v966 = vld.sshfl [vmem:[#allocation1 + $0x8] sm:$0xff pattern:$0x75316420]
      %967 = vrot.lane.b32.xlu0 %v965, 96
      %v968 = vpop.permute.xlu0 %967
      %969 = vrot.lane.b32.xlu0 %v966, 96
      %v970 = vpop.permute.xlu0 %969
      %v971 = vsel %vm705, %v968, %v970
      %v974 = vsel %vm864, %v971, 0.0
      %v975 = vsel %vm865, %v970, 0.0
      %976 = vst [vmem:[#allocation7 + $0x30] sm:$0xf] %v974
      %977 = vst.msk [vmem:[#allocation7 + $0x38] sm:$0xf] %vm307, %v975
      %s978 = scalar_lea.vmem [#allocation1], 1
      %979 = vst [vmem:[%s978] ss:$2 sm:$0xff] %v861
      %v980 = vld.sshfl [vmem:[#allocation1] sm:$0xff pattern:$0x75316420]
      %v981 = vld.sshfl [vmem:[#allocation1 + $0x8] sm:$0xff pattern:$0x75316420]
      %982 = vrot.lane.b32.xlu0 %v980, 95
      %v983 = vpop.permute.xlu0 %982
      %984 = vrot.lane.b32.xlu0 %v981, 95
      %v985 = vpop.permute.xlu0 %984
      %vm986 = vcmask 777216
      %v987 = vsel %vm986, %v983, %v985
      %990 = vst [vmem:[#allocation7 + $0x30] sm:$0xf0] %v987
      %991 = vst.msk [vmem:[#allocation7 + $0x38] sm:$0xf0] %vm889, %v985
      %992 = vst [vmem:[#allocation1] ss:$2 sm:$0xff] %v861
      %v993 = vld.sshfl [vmem:[#allocation1] sm:$0xff pattern:$0x75316420]
      %v994 = vld.sshfl [vmem:[#allocation1 + $0x8] sm:$0xff pattern:$0x75316420]
      %995 = vrot.lane.b32.xlu0 %v993, 94
      %v996 = vpop.permute.xlu0 %995
      %997 = vrot.lane.b32.xlu0 %v994, 94
      %v998 = vpop.permute.xlu0 %997
      %vm999 = vcmask 769024
      %v1000 = vsel %vm999, %v996, %v998
      %v1003 = vsel %vm893, %v1000, 0.0
      %v1004 = vsel %vm894, %v998, 0.0
      %1005 = vst [vmem:[#allocation7 + $0x40] sm:$0xf] %v1003
      %1006 = vst.msk [vmem:[#allocation7 + $0x48] sm:$0xf] %vm307, %v1004
      %v1007 = vld [vmem:[%s4] sm:$0x3]
      %v1008 = vld [vmem:[#allocation7] sm:$0xff]
      %v1009 = vld [vmem:[#allocation7 + $0x8] sm:$0xff]
      %v1010 = vld [vmem:[#allocation7 + $0x10] sm:$0xff]
      %v1011 = vld [vmem:[#allocation7 + $0x18] sm:$0xff]
      %v1012 = vld [vmem:[#allocation7 + $0x20] sm:$0xff]
      %v1013 = vld [vmem:[#allocation7 + $0x28] sm:$0xff]
      %v1014 = vld [vmem:[#allocation7 + $0x30] sm:$0xff]
      %v1015 = vld [vmem:[#allocation7 + $0x38] sm:$0xff]
      %v1016 = vld [vmem:[#allocation7 + $0x40] sm:$0xf]
      %v1017 = vld [vmem:[#allocation7 + $0x48] sm:$0xf]
      %v1018 = vpack.c.bf16 %v1010, %v1008
      %v1019 = vpack.c.bf16 %v1011, %v1009
      %v1020 = vpack.c.bf16 %v1014, %v1012
      %v1021 = vpack.c.bf16 %v1015, %v1013
      %v1022 = vpack.c.bf16 %v1016, %v1016
      %v1023 = vpack.c.bf16 %v1017, %v1017
      %1024 = vset.pattern.permute.xlu0 12
      %1025 = vperm.xlu0 %1024, %v324
      %v1026 = vpop.permute.xlu0 %1025
      %vm1028 = vcmask 293888
      %v1030 = vsel %vm1028, %v1007, 0
      %vm1032 = vcmask 1041408
      %v1034 = vsel %vm1032, %v1022, 0
      %v1037 = vsel %vm1032, %v1023, 0
      %1039 = vmatpush.bf16.msra.mxu0 0
      %1040 = vmatpush.bf16.msra.mxu0 0
      %1041 = vmatpush.bf16.msra.mxu0 0
      %1042 = vmatpush.bf16.msra.mxu0 0
      %1043 = vmatpush.bf16.msra.mxu0 0
      %1044 = vmatpush.bf16.msra.mxu0 %v1034
      %1045 = vmatpush.bf16.msra.mxu0 %v1020
      %1046 = vmatpush.bf16.msra.mxu0 %v1018
      %1047 = vmatmul.bf16.gmra.mxu0 %v1030
      %v1048 = vpop.f32.mrf.mxu0
      %v1049 = vadd.f32 %v1026, %v1048
      %v1050 = vpop.f32.mrf.mxu0
      %1051 = vdwg.mxu0
      %1052 = vmatpush.bf16.msra.mxu0 0
      %1053 = vmatpush.bf16.msra.mxu0 0
      %1054 = vmatpush.bf16.msra.mxu0 0
      %1055 = vmatpush.bf16.msra.mxu0 0
      %1056 = vmatpush.bf16.msra.mxu0 0
      %1057 = vmatpush.bf16.msra.mxu0 %v1037
      %1058 = vmatpush.bf16.msra.mxu0 %v1021
      %1059 = vmatpush.bf16.msra.mxu0 %v1019
      %1060 = vmatmul.bf16.gmra.mxu0 %v1030
      %v1061 = vpop.f32.mrf.mxu0
      %v1062 = vadd.f32 %v1026, %v1061
      %v1063 = vpop.f32.mrf.mxu0
      %1064 = vdwg.mxu0
      %v1065 = vmax.f32 %v1049, 0.0
      %v1066 = vmax.f32 %v1062, 0.0
      %v1069 = vrot.slane %v1066, 4
      %v1070 = vsel %vm647, %v1065, %v1069
      %1071 = vrot.lane.b32.xlu0 %v1070, 17
      %v1072 = vpop.permute.xlu0 %1071
      %v1073 = vrot.slane %v1072, 4
      %v1074 = vsel %vm316, %v1073, %v1072
      %1076 = vst.msk [vmem:[#allocation4] sm:$0xff] %vm859, %v1074
      %v1077 = vld [vmem:[#allocation4] sm:$0xff]
      %1079 = vst [vmem:[#allocation1] ss:$2 sm:$0xff] %v1077
      %v1080 = vld.sshfl [vmem:[#allocation1] sm:$0xff pattern:$0x75316420]
      %v1081 = vld.sshfl [vmem:[#allocation1 + $0x8] sm:$0xff pattern:$0x75316420]
      %v1084 = vsel %vm864, %v1080, 0.0
      %v1085 = vsel %vm865, %v1081, 0.0
      %1086 = vst [vmem:[#allocation7] sm:$0xf] %v1084
      %1087 = vst.msk [vmem:[#allocation7 + $0x8] sm:$0xf] %vm307, %v1085
      %s1088 = scalar_lea.vmem [#allocation1], 1
      %1089 = vst [vmem:[%s1088] ss:$2 sm:$0xff] %v1077
      %v1090 = vld.sshfl [vmem:[#allocation1] sm:$0xff pattern:$0x75316420]
      %v1091 = vld.sshfl [vmem:[#allocation1 + $0x8] sm:$0xff pattern:$0x75316420]
      %1092 = vrot.lane.b32.xlu0 %v1090, 127
      %v1093 = vpop.permute.xlu0 %1092
      %1094 = vrot.lane.b32.xlu0 %v1091, 127
      %v1095 = vpop.permute.xlu0 %1094
      %v1096 = vsel %vm884, %v1093, %v1095
      %1099 = vst [vmem:[#allocation7] sm:$0xf0] %v1096
      %1100 = vst.msk [vmem:[#allocation7 + $0x8] sm:$0xf0] %vm889, %v1095
      %1101 = vst [vmem:[#allocation1] ss:$2 sm:$0xff] %v1077
      %v1102 = vld.sshfl [vmem:[#allocation1] sm:$0xff pattern:$0x75316420]
      %v1103 = vld.sshfl [vmem:[#allocation1 + $0x8] sm:$0xff pattern:$0x75316420]
      %1104 = vrot.lane.b32.xlu0 %v1102, 126
      %v1105 = vpop.permute.xlu0 %1104
      %1106 = vrot.lane.b32.xlu0 %v1103, 126
      %v1107 = vpop.permute.xlu0 %1106
      %v1108 = vsel %vm902, %v1105, %v1107
      %v1111 = vsel %vm893, %v1108, 0.0
      %v1112 = vsel %vm894, %v1107, 0.0
      %1113 = vst [vmem:[#allocation7 + $0x10] sm:$0xf] %v1111
      %1114 = vst.msk [vmem:[#allocation7 + $0x18] sm:$0xf] %vm307, %v1112
      %1115 = vst [vmem:[#allocation1] ss:$2 sm:$0xff] %v1077
      %v1116 = vld.sshfl [vmem:[#allocation1] sm:$0xff pattern:$0x75316420]
      %v1117 = vld.sshfl [vmem:[#allocation1 + $0x8] sm:$0xff pattern:$0x75316420]
      %1118 = vrot.lane.b32.xlu0 %v1116, 112
      %v1119 = vpop.permute.xlu0 %1118
      %1120 = vrot.lane.b32.xlu0 %v1117, 112
      %v1121 = vpop.permute.xlu0 %1120
      %v1122 = vsel %vm686, %v1119, %v1121
      %v1125 = vsel %vm864, %v1122, 0.0
      %v1126 = vsel %vm865, %v1121, 0.0
      %v1129 = vrot.slane %v1125, 4
      %v1130 = vrot.slane %v1126, 4
      %1133 = vst [vmem:[#allocation7 + $0x10] sm:$0xf0] %v1129
      %1134 = vst.msk [vmem:[#allocation7 + $0x18] sm:$0xf0] %vm889, %v1130
      %1135 = vst [vmem:[#allocation1] ss:$2 sm:$0xff] %v1077
      %v1136 = vld.sshfl [vmem:[#allocation1] sm:$0xff pattern:$0x75316420]
      %v1137 = vld.sshfl [vmem:[#allocation1 + $0x8] sm:$0xff pattern:$0x75316420]
      %1138 = vrot.lane.b32.xlu0 %v1136, 111
      %v1139 = vpop.permute.xlu0 %1138
      %1140 = vrot.lane.b32.xlu0 %v1137, 111
      %v1141 = vpop.permute.xlu0 %1140
      %v1142 = vsel %vm937, %v1139, %v1141
      %1145 = vst [vmem:[#allocation7 + $0x20] sm:$0xf] %v1142
      %1146 = vst.msk [vmem:[#allocation7 + $0x28] sm:$0xf] %vm307, %v1141
      %1147 = vst [vmem:[#allocation1] ss:$2 sm:$0xff] %v1077
      %v1148 = vld.sshfl [vmem:[#allocation1] sm:$0xff pattern:$0x75316420]
      %v1149 = vld.sshfl [vmem:[#allocation1 + $0x8] sm:$0xff pattern:$0x75316420]
      %1150 = vrot.lane.b32.xlu0 %v1148, 110
      %v1151 = vpop.permute.xlu0 %1150
      %1152 = vrot.lane.b32.xlu0 %v1149, 110
      %v1153 = vpop.permute.xlu0 %1152
      %v1154 = vsel %vm950, %v1151, %v1153
      %v1157 = vsel %vm893, %v1154, 0.0
      %v1158 = vsel %vm894, %v1153, 0.0
      %v1161 = vrot.slane %v1157, 4
      %v1162 = vrot.slane %v1158, 4
      %1165 = vst [vmem:[#allocation7 + $0x20] sm:$0xf0] %v1161
      %1166 = vst.msk [vmem:[#allocation7 + $0x28] sm:$0xf0] %vm889, %v1162
      %1167 = vst [vmem:[#allocation1] ss:$2 sm:$0xff] %v1077
      %v1168 = vld.sshfl [vmem:[#allocation1] sm:$0xff pattern:$0x75316420]
      %v1169 = vld.sshfl [vmem:[#allocation1 + $0x8] sm:$0xff pattern:$0x75316420]
      %1170 = vrot.lane.b32.xlu0 %v1168, 96
      %v1171 = vpop.permute.xlu0 %1170
      %1172 = vrot.lane.b32.xlu0 %v1169, 96
      %v1173 = vpop.permute.xlu0 %1172
      %v1174 = vsel %vm705, %v1171, %v1173
      %v1177 = vsel %vm864, %v1174, 0.0
      %v1178 = vsel %vm865, %v1173, 0.0
      %1179 = vst [vmem:[#allocation7 + $0x30] sm:$0xf] %v1177
      %1180 = vst.msk [vmem:[#allocation7 + $0x38] sm:$0xf] %vm307, %v1178
      %s1181 = scalar_lea.vmem [#allocation1], 1
      %1182 = vst [vmem:[%s1181] ss:$2 sm:$0xff] %v1077
      %v1183 = vld.sshfl [vmem:[#allocation1] sm:$0xff pattern:$0x75316420]
      %v1184 = vld.sshfl [vmem:[#allocation1 + $0x8] sm:$0xff pattern:$0x75316420]
      %1185 = vrot.lane.b32.xlu0 %v1183, 95
      %v1186 = vpop.permute.xlu0 %1185
      %1187 = vrot.lane.b32.xlu0 %v1184, 95
      %v1188 = vpop.permute.xlu0 %1187
      %v1189 = vsel %vm986, %v1186, %v1188
      %1192 = vst [vmem:[#allocation7 + $0x30] sm:$0xf0] %v1189
      %1193 = vst.msk [vmem:[#allocation7 + $0x38] sm:$0xf0] %vm889, %v1188
      %1194 = vst [vmem:[#allocation1] ss:$2 sm:$0xff] %v1077
      %v1195 = vld.sshfl [vmem:[#allocation1] sm:$0xff pattern:$0x75316420]
      %v1196 = vld.sshfl [vmem:[#allocation1 + $0x8] sm:$0xff pattern:$0x75316420]
      %1197 = vrot.lane.b32.xlu0 %v1195, 94
      %v1198 = vpop.permute.xlu0 %1197
      %1199 = vrot.lane.b32.xlu0 %v1196, 94
      %v1200 = vpop.permute.xlu0 %1199
      %v1201 = vsel %vm999, %v1198, %v1200
      %v1204 = vsel %vm893, %v1201, 0.0
      %v1205 = vsel %vm894, %v1200, 0.0
      %1206 = vst [vmem:[#allocation7 + $0x40] sm:$0xf] %v1204
      %1207 = vst.msk [vmem:[#allocation7 + $0x48] sm:$0xf] %vm307, %v1205
      %v1208 = vld [vmem:[%s5] sm:$0x3]
      %v1209 = vld [vmem:[#allocation7] sm:$0xff]
      %v1210 = vld [vmem:[#allocation7 + $0x8] sm:$0xff]
      %v1211 = vld [vmem:[#allocation7 + $0x10] sm:$0xff]
      %v1212 = vld [vmem:[#allocation7 + $0x18] sm:$0xff]
      %v1213 = vld [vmem:[#allocation7 + $0x20] sm:$0xff]
      %v1214 = vld [vmem:[#allocation7 + $0x28] sm:$0xff]
      %v1215 = vld [vmem:[#allocation7 + $0x30] sm:$0xff]
      %v1216 = vld [vmem:[#allocation7 + $0x38] sm:$0xff]
      %v1217 = vld [vmem:[#allocation7 + $0x40] sm:$0xf]
      %v1218 = vld [vmem:[#allocation7 + $0x48] sm:$0xf]
      %v1219 = vpack.c.bf16 %v1211, %v1209
      %v1220 = vpack.c.bf16 %v1212, %v1210
      %v1221 = vpack.c.bf16 %v1215, %v1213
      %v1222 = vpack.c.bf16 %v1216, %v1214
      %v1223 = vpack.c.bf16 %v1217, %v1217
      %v1224 = vpack.c.bf16 %v1218, %v1218
      %1225 = vset.pattern.permute.xlu0 13
      %1226 = vperm.xlu0 %1225, %v324
      %v1227 = vpop.permute.xlu0 %1226
      %v1230 = vsel %vm1028, %v1208, 0
      %v1233 = vsel %vm1032, %v1223, 0
      %v1236 = vsel %vm1032, %v1224, 0
      %1238 = vmatpush.bf16.msra.mxu0 0
      %1239 = vmatpush.bf16.msra.mxu0 0
      %1240 = vmatpush.bf16.msra.mxu0 0
      %1241 = vmatpush.bf16.msra.mxu0 0
      %1242 = vmatpush.bf16.msra.mxu0 0
      %1243 = vmatpush.bf16.msra.mxu0 %v1233
      %1244 = vmatpush.bf16.msra.mxu0 %v1221
      %1245 = vmatpush.bf16.msra.mxu0 %v1219
      %1246 = vmatmul.bf16.gmra.mxu0 %v1230
      %v1247 = vpop.f32.mrf.mxu0
      %v1248 = vadd.f32 %v1227, %v1247
      %v1249 = vpop.f32.mrf.mxu0
      %1250 = vdwg.mxu0
      %1251 = vmatpush.bf16.msra.mxu0 0
      %1252 = vmatpush.bf16.msra.mxu0 0
      %1253 = vmatpush.bf16.msra.mxu0 0
      %1254 = vmatpush.bf16.msra.mxu0 0
      %1255 = vmatpush.bf16.msra.mxu0 0
      %1256 = vmatpush.bf16.msra.mxu0 %v1236
      %1257 = vmatpush.bf16.msra.mxu0 %v1222
      %1258 = vmatpush.bf16.msra.mxu0 %v1220
      %1259 = vmatmul.bf16.gmra.mxu0 %v1230
      %v1260 = vpop.f32.mrf.mxu0
      %v1261 = vadd.f32 %v1227, %v1260
      %v1262 = vpop.f32.mrf.mxu0
      %1263 = vdwg.mxu0
      %v1264 = vmax.f32 %v1248, 0.0
      %v1265 = vmax.f32 %v1261, 0.0
      %v1266 = vpack.c.bf16 %v1264, %v1264
      %v1267 = vpack.c.bf16 %v1265, %v1265
      %v1268 = vld [vmem:[%s2] sm:$0xff]
      %v1269 = vld [vmem:[%s2 + $0x8] sm:$0xff]
      %v1270 = vld [vmem:[%s2 + $0x10] sm:$0xff]
      %v1271 = vld [vmem:[%s2 + $0x18] sm:$0xff]
      %v1272 = vld [vmem:[%s2 + $0x20] sm:$0xff]
      %v1273 = vld [vmem:[%s2 + $0x28] sm:$0xff]
      %v1274 = vld [vmem:[%s2 + $0x30] sm:$0xff]
      %v1275 = vld [vmem:[%s2 + $0x38] sm:$0xff]
      %v1276 = vld [vmem:[%s2 + $0x40] sm:$0xff]
      %v1277 = vld [vmem:[%s2 + $0x48] sm:$0xff]
      %v1278 = vld [vmem:[%s2 + $0x50] sm:$0xff]
      %v1279 = vld [vmem:[%s2 + $0x58] sm:$0xff]
      %v1280 = vld [vmem:[%s2 + $0x60] sm:$0xff]
      %v1281 = vld [vmem:[%s2 + $0x68] sm:$0xff]
      %v1282 = vld [vmem:[%s2 + $0x70] sm:$0xff]
      %v1283 = vld [vmem:[%s2 + $0x78] sm:$0xff]
      %v1284 = vld [vmem:[%s2 + $0x80] sm:$0xff]
      %v1285 = vld [vmem:[%s2 + $0x88] sm:$0xff]
      %v1286 = vld [vmem:[%s2 + $0x90] sm:$0xff]
      %v1287 = vld [vmem:[%s2 + $0x98] sm:$0xff]
      %v1288 = vld [vmem:[%s2 + $0xa0] sm:$0xff]
      %v1289 = vld [vmem:[%s2 + $0xa8] sm:$0xff]
      %v1290 = vld [vmem:[%s2 + $0xb0] sm:$0xff]
      %v1291 = vld [vmem:[%s2 + $0xb8] sm:$0xff]
      %v1316 = vunpack.c.l.b16 %v1268
      %v1317 = vunpack.c.h.b16 %v1268
      %v1318 = vunpack.c.l.b16 %v1269
      %v1319 = vunpack.c.h.b16 %v1269
      %v1320 = vunpack.c.l.b16 %v1270
      %v1321 = vunpack.c.h.b16 %v1270
      %v1322 = vunpack.c.l.b16 %v1271
      %v1323 = vunpack.c.h.b16 %v1271
      %v1324 = vunpack.c.l.b16 %v1272
      %v1325 = vunpack.c.h.b16 %v1272
      %v1326 = vunpack.c.l.b16 %v1273
      %v1327 = vunpack.c.h.b16 %v1273
      %v1328 = vunpack.c.l.b16 %v1274
      %v1329 = vunpack.c.h.b16 %v1274
      %v1330 = vunpack.c.l.b16 %v1275
      %v1331 = vunpack.c.h.b16 %v1275
      %v1332 = vunpack.c.l.b16 %v1276
      %v1333 = vunpack.c.h.b16 %v1276
      %v1334 = vunpack.c.l.b16 %v1277
      %v1335 = vunpack.c.h.b16 %v1277
      %v1336 = vunpack.c.l.b16 %v1278
      %v1337 = vunpack.c.h.b16 %v1278
      %v1338 = vunpack.c.l.b16 %v1279
      %v1339 = vunpack.c.h.b16 %v1279
      %v1340 = vunpack.c.l.b16 %v1280
      %v1341 = vunpack.c.h.b16 %v1280
      %v1342 = vunpack.c.l.b16 %v1281
      %v1343 = vunpack.c.h.b16 %v1281
      %v1344 = vunpack.c.l.b16 %v1282
      %v1345 = vunpack.c.h.b16 %v1282
      %v1346 = vunpack.c.l.b16 %v1283
      %v1347 = vunpack.c.h.b16 %v1283
      %v1348 = vunpack.c.l.b16 %v1284
      %v1349 = vunpack.c.h.b16 %v1284
      %v1350 = vunpack.c.l.b16 %v1285
      %v1351 = vunpack.c.h.b16 %v1285
      %v1352 = vunpack.c.l.b16 %v1286
      %v1353 = vunpack.c.h.b16 %v1286
      %v1354 = vunpack.c.l.b16 %v1287
      %v1355 = vunpack.c.h.b16 %v1287
      %v1356 = vunpack.c.l.b16 %v1288
      %v1357 = vunpack.c.h.b16 %v1288
      %v1358 = vunpack.c.l.b16 %v1289
      %v1359 = vunpack.c.h.b16 %v1289
      %v1360 = vunpack.c.l.b16 %v1290
      %v1361 = vunpack.c.h.b16 %v1290
      %v1362 = vunpack.c.l.b16 %v1291
      %v1363 = vunpack.c.h.b16 %v1291
      %v1364 = vpack.c.b16 %v1318, %v1316
      %v1365 = vpack.c.b16 %v1319, %v1317
      %v1366 = vpack.c.b16 %v1322, %v1320
      %v1367 = vpack.c.b16 %v1323, %v1321
      %v1368 = vpack.c.b16 %v1326, %v1324
      %v1369 = vpack.c.b16 %v1327, %v1325
      %v1370 = vpack.c.b16 %v1330, %v1328
      %v1371 = vpack.c.b16 %v1331, %v1329
      %v1372 = vpack.c.b16 %v1334, %v1332
      %v1373 = vpack.c.b16 %v1335, %v1333
      %v1374 = vpack.c.b16 %v1338, %v1336
      %v1375 = vpack.c.b16 %v1339, %v1337
      %v1376 = vpack.c.b16 %v1342, %v1340
      %v1377 = vpack.c.b16 %v1343, %v1341
      %v1378 = vpack.c.b16 %v1346, %v1344
      %v1379 = vpack.c.b16 %v1347, %v1345
      %v1380 = vpack.c.b16 %v1350, %v1348
      %v1381 = vpack.c.b16 %v1351, %v1349
      %v1382 = vpack.c.b16 %v1354, %v1352
      %v1383 = vpack.c.b16 %v1355, %v1353
      %v1384 = vpack.c.b16 %v1358, %v1356
      %v1385 = vpack.c.b16 %v1359, %v1357
      %v1386 = vpack.c.b16 %v1362, %v1360
      %v1387 = vpack.c.b16 %v1363, %v1361
      %v1413 = vsel %vm652, %v1267, 0
      %1415 = vmatpush.bf16.msra.mxu0 %v1378
      %1416 = vmatpush.bf16.msra.mxu0 %v1376
      %1417 = vmatpush.bf16.msra.mxu0 %v1374
      %1418 = vmatpush.bf16.msra.mxu0 %v1372
      %1419 = vmatpush.bf16.msra.mxu0 %v1370
      %1420 = vmatpush.bf16.msra.mxu0 %v1368
      %1421 = vmatpush.bf16.msra.mxu0 %v1366
      %1422 = vmatpush.bf16.msra.mxu0 %v1364
      %1423 = vmatmul.bf16.gmra.mxu0 %v1266
      %v1424 = vpop.f32.mrf.mxu0
      %v1425 = vadd.f32 0.0, %v1424
      %v1426 = vpop.f32.mrf.mxu0
      %1427 = vdwg.mxu0
      %1428 = vmatpush.bf16.msra.mxu0 0
      %1429 = vmatpush.bf16.msra.mxu0 0
      %1430 = vmatpush.bf16.msra.mxu0 0
      %1431 = vmatpush.bf16.msra.mxu0 0
      %1432 = vmatpush.bf16.msra.mxu0 %v1386
      %1433 = vmatpush.bf16.msra.mxu0 %v1384
      %1434 = vmatpush.bf16.msra.mxu0 %v1382
      %1435 = vmatpush.bf16.msra.mxu0 %v1380
      %1436 = vmatmul.bf16.gmra.mxu0 %v1413
      %v1437 = vpop.f32.mrf.mxu0
      %v1438 = vadd.f32 %v1425, %v1437
      %v1439 = vpop.f32.mrf.mxu0
      %1440 = vdwg.mxu0
      %1441 = vmatpush.bf16.msra.mxu0 %v1379
      %1442 = vmatpush.bf16.msra.mxu0 %v1377
      %1443 = vmatpush.bf16.msra.mxu0 %v1375
      %1444 = vmatpush.bf16.msra.mxu0 %v1373
      %1445 = vmatpush.bf16.msra.mxu0 %v1371
      %1446 = vmatpush.bf16.msra.mxu0 %v1369
      %1447 = vmatpush.bf16.msra.mxu0 %v1367
      %1448 = vmatpush.bf16.msra.mxu0 %v1365
      %1449 = vmatmul.bf16.gmra.mxu0 %v1266
      %v1450 = vpop.f32.mrf.mxu0
      %v1451 = vadd.f32 0.0, %v1450
      %v1452 = vpop.f32.mrf.mxu0
      %1453 = vdwg.mxu0
      %1454 = vmatpush.bf16.msra.mxu0 0
      %1455 = vmatpush.bf16.msra.mxu0 0
      %1456 = vmatpush.bf16.msra.mxu0 0
      %1457 = vmatpush.bf16.msra.mxu0 0
      %1458 = vmatpush.bf16.msra.mxu0 %v1387
      %1459 = vmatpush.bf16.msra.mxu0 %v1385
      %1460 = vmatpush.bf16.msra.mxu0 %v1383
      %1461 = vmatpush.bf16.msra.mxu0 %v1381
      %1462 = vmatmul.bf16.gmra.mxu0 %v1413
      %v1463 = vpop.f32.mrf.mxu0
      %v1464 = vadd.f32 %v1451, %v1463
      %v1465 = vpop.f32.mrf.mxu0
      %1466 = vdwg.mxu0
      %v1469 = vrot.slane %v1438, 4
      %v1470 = vrot.slane %v1464, 4
      %1471 = vrot.lane.b32.xlu0 %v1469, 17
      %v1472 = vpop.permute.xlu0 %1471
      %1473 = vrot.lane.b32.xlu0 %v1470, 17
      %v1474 = vpop.permute.xlu0 %1473
      %v1475 = vsel %vm316, %v1472, %v1474
      %vm1479 = vcmask 1047692
      %1480 = vst.msk [vmem:[#allocation5] sm:$0xf0] %vm1479, %v1472
      %1481 = vst [vmem:[#allocation5 + $0x8] sm:$0xf0] %v1475
      %vm1482 = vcmask 138244
      %1483 = vst.msk [vmem:[#allocation5 + $0x10] sm:$0xf0] %vm1482, %v1474
      %v1484 = vld [vmem:[#allocation5] sm:$0xff]
      %v1485 = vld [vmem:[#allocation5 + $0x8] sm:$0xff]
      %v1486 = vld [vmem:[#allocation5 + $0x10] sm:$0xff]
      %v1487 = vsel %vm864, %v1484, 0.0
      %v1488 = vsel %vm865, %v1485, 0.0
      %1489 = vst [vmem:[#allocation8] sm:$0xff] %v1487
      %1490 = vst [vmem:[#allocation8 + $0x8] sm:$0xff] %v1488
      %1494 = vrot.lane.b32.xlu0 %v1484, 127
      %v1495 = vpop.permute.xlu0 %1494
      %1496 = vrot.lane.b32.xlu0 %v1485, 127
      %v1497 = vpop.permute.xlu0 %1496
      %1498 = vrot.lane.b32.xlu0 %v1486, 127
      %v1499 = vpop.permute.xlu0 %1498
      %v1500 = vsel %vm884, %v1495, %v1497
      %v1501 = vsel %vm884, %v1497, %v1499
      %1504 = vst [vmem:[#allocation8 + $0x10] sm:$0xff] %v1500
      %1505 = vst [vmem:[#allocation8 + $0x18] sm:$0xff] %v1501
      %1506 = vrot.lane.b32.xlu0 %v1484, 126
      %v1507 = vpop.permute.xlu0 %1506
      %1508 = vrot.lane.b32.xlu0 %v1485, 126
      %v1509 = vpop.permute.xlu0 %1508
      %1510 = vrot.lane.b32.xlu0 %v1486, 126
      %v1511 = vpop.permute.xlu0 %1510
      %v1512 = vsel %vm902, %v1507, %v1509
      %v1513 = vsel %vm902, %v1509, %v1511
      %v1516 = vsel %vm893, %v1512, 0.0
      %v1517 = vsel %vm894, %v1513, 0.0
      %1518 = vst [vmem:[#allocation8 + $0x20] sm:$0xff] %v1516
      %1519 = vst [vmem:[#allocation8 + $0x28] sm:$0xff] %v1517
      %1520 = vrot.lane.b32.xlu0 %v1484, 112
      %v1521 = vpop.permute.xlu0 %1520
      %1522 = vrot.lane.b32.xlu0 %v1485, 112
      %v1523 = vpop.permute.xlu0 %1522
      %1524 = vrot.lane.b32.xlu0 %v1486, 112
      %v1525 = vpop.permute.xlu0 %1524
      %v1526 = vsel %vm686, %v1521, %v1523
      %v1527 = vsel %vm686, %v1523, %v1525
      %v1530 = vsel %vm864, %v1526, 0.0
      %v1531 = vsel %vm865, %v1527, 0.0
      %1532 = vst [vmem:[#allocation8 + $0x30] sm:$0xff] %v1530
      %1533 = vst [vmem:[#allocation8 + $0x38] sm:$0xff] %v1531
      %1534 = vrot.lane.b32.xlu0 %v1484, 111
      %v1535 = vpop.permute.xlu0 %1534
      %1536 = vrot.lane.b32.xlu0 %v1485, 111
      %v1537 = vpop.permute.xlu0 %1536
      %1538 = vrot.lane.b32.xlu0 %v1486, 111
      %v1539 = vpop.permute.xlu0 %1538
      %v1540 = vsel %vm937, %v1535, %v1537
      %v1541 = vsel %vm937, %v1537, %v1539
      %1544 = vst [vmem:[#allocation8 + $0x40] sm:$0xff] %v1540
      %1545 = vst [vmem:[#allocation8 + $0x48] sm:$0xff] %v1541
      %1546 = vrot.lane.b32.xlu0 %v1484, 110
      %v1547 = vpop.permute.xlu0 %1546
      %1548 = vrot.lane.b32.xlu0 %v1485, 110
      %v1549 = vpop.permute.xlu0 %1548
      %1550 = vrot.lane.b32.xlu0 %v1486, 110
      %v1551 = vpop.permute.xlu0 %1550
      %v1552 = vsel %vm950, %v1547, %v1549
      %v1553 = vsel %vm950, %v1549, %v1551
      %v1556 = vsel %vm893, %v1552, 0.0
      %v1557 = vsel %vm894, %v1553, 0.0
      %1558 = vst [vmem:[#allocation8 + $0x50] sm:$0xff] %v1556
      %1559 = vst [vmem:[#allocation8 + $0x58] sm:$0xff] %v1557
      %1560 = vrot.lane.b32.xlu0 %v1484, 96
      %v1561 = vpop.permute.xlu0 %1560
      %1562 = vrot.lane.b32.xlu0 %v1485, 96
      %v1563 = vpop.permute.xlu0 %1562
      %1564 = vrot.lane.b32.xlu0 %v1486, 96
      %v1565 = vpop.permute.xlu0 %1564
      %v1566 = vsel %vm705, %v1561, %v1563
      %v1567 = vsel %vm705, %v1563, %v1565
      %v1570 = vsel %vm864, %v1566, 0.0
      %v1571 = vsel %vm865, %v1567, 0.0
      %1572 = vst [vmem:[#allocation8 + $0x60] sm:$0xff] %v1570
      %1573 = vst [vmem:[#allocation8 + $0x68] sm:$0xff] %v1571
      %1574 = vrot.lane.b32.xlu0 %v1484, 95
      %v1575 = vpop.permute.xlu0 %1574
      %1576 = vrot.lane.b32.xlu0 %v1485, 95
      %v1577 = vpop.permute.xlu0 %1576
      %1578 = vrot.lane.b32.xlu0 %v1486, 95
      %v1579 = vpop.permute.xlu0 %1578
      %v1580 = vsel %vm986, %v1575, %v1577
      %v1581 = vsel %vm986, %v1577, %v1579
      %1584 = vst [vmem:[#allocation8 + $0x70] sm:$0xff] %v1580
      %1585 = vst [vmem:[#allocation8 + $0x78] sm:$0xff] %v1581
      %1586 = vrot.lane.b32.xlu0 %v1484, 94
      %v1587 = vpop.permute.xlu0 %1586
      %1588 = vrot.lane.b32.xlu0 %v1485, 94
      %v1589 = vpop.permute.xlu0 %1588
      %1590 = vrot.lane.b32.xlu0 %v1486, 94
      %v1591 = vpop.permute.xlu0 %1590
      %v1592 = vsel %vm999, %v1587, %v1589
      %v1593 = vsel %vm999, %v1589, %v1591
      %v1596 = vsel %vm893, %v1592, 0.0
      %v1597 = vsel %vm894, %v1593, 0.0
      %1598 = vst [vmem:[#allocation8 + $0x80] sm:$0xff] %v1596
      %1599 = vst [vmem:[#allocation8 + $0x88] sm:$0xff] %v1597
      %v1600 = vld [vmem:[%s6] sm:$0xf]
      %v1601 = vld [vmem:[%s6 + $0x4] sm:$0xf]
      %v1602 = vld [vmem:[#allocation8] sm:$0xff]
      %v1603 = vld [vmem:[#allocation8 + $0x8] sm:$0xff]
      %v1604 = vld [vmem:[#allocation8 + $0x10] sm:$0xff]
      %v1605 = vld [vmem:[#allocation8 + $0x18] sm:$0xff]
      %v1606 = vld [vmem:[#allocation8 + $0x20] sm:$0xff]
      %v1607 = vld [vmem:[#allocation8 + $0x28] sm:$0xff]
      %v1608 = vld [vmem:[#allocation8 + $0x30] sm:$0xff]
      %v1609 = vld [vmem:[#allocation8 + $0x38] sm:$0xff]
      %v1610 = vld [vmem:[#allocation8 + $0x40] sm:$0xff]
      %v1611 = vld [vmem:[#allocation8 + $0x48] sm:$0xff]
      %v1612 = vld [vmem:[#allocation8 + $0x50] sm:$0xff]
      %v1613 = vld [vmem:[#allocation8 + $0x58] sm:$0xff]
      %v1614 = vld [vmem:[#allocation8 + $0x60] sm:$0xff]
      %v1615 = vld [vmem:[#allocation8 + $0x68] sm:$0xff]
      %v1616 = vld [vmem:[#allocation8 + $0x70] sm:$0xff]
      %v1617 = vld [vmem:[#allocation8 + $0x78] sm:$0xff]
      %v1618 = vld [vmem:[#allocation8 + $0x80] sm:$0xff]
      %v1619 = vld [vmem:[#allocation8 + $0x88] sm:$0xff]
      %v1620 = vpack.c.bf16 %v1604, %v1602
      %v1621 = vpack.c.bf16 %v1605, %v1603
      %v1622 = vpack.c.bf16 %v1608, %v1606
      %v1623 = vpack.c.bf16 %v1609, %v1607
      %v1624 = vpack.c.bf16 %v1612, %v1610
      %v1625 = vpack.c.bf16 %v1613, %v1611
      %v1626 = vpack.c.bf16 %v1616, %v1614
      %v1627 = vpack.c.bf16 %v1617, %v1615
      %v1628 = vpack.c.bf16 %v1618, %v1618
      %v1629 = vpack.c.bf16 %v1619, %v1619
      %v1632 = vunpack.c.l.b16 %v1600
      %v1633 = vunpack.c.l.b16 %v1601
      %v1634 = vpack.c.b16 %v1633, %v1632
      %vm1635 = vcmask 588800
      %v1637 = vsel %vm1635, %v1634, 0
      %v1640 = vsel %vm647, %v1628, 0
      %v1643 = vsel %vm647, %v1629, 0
      %1645 = vmatpush.bf16.msra.mxu0 0
      %1646 = vmatpush.bf16.msra.mxu0 0
      %1647 = vmatpush.bf16.msra.mxu0 0
      %1648 = vmatpush.bf16.msra.mxu0 %v1640
      %1649 = vmatpush.bf16.msra.mxu0 %v1626
      %1650 = vmatpush.bf16.msra.mxu0 %v1624
      %1651 = vmatpush.bf16.msra.mxu0 %v1622
      %1652 = vmatpush.bf16.msra.mxu0 %v1620
      %1653 = vmatmul.bf16.gmra.mxu0 %v1637
      %v1654 = vpop.f32.mrf.mxu0
      %v1655 = vadd.f32 0.0, %v1654
      %v1656 = vpop.f32.mrf.mxu0
      %v1657 = vadd.f32 0.0, %v1656
      %1658 = vdwg.mxu0
      %1659 = vmatpush.bf16.msra.mxu0 0
      %1660 = vmatpush.bf16.msra.mxu0 0
      %1661 = vmatpush.bf16.msra.mxu0 0
      %1662 = vmatpush.bf16.msra.mxu0 %v1643
      %1663 = vmatpush.bf16.msra.mxu0 %v1627
      %1664 = vmatpush.bf16.msra.mxu0 %v1625
      %1665 = vmatpush.bf16.msra.mxu0 %v1623
      %1666 = vmatpush.bf16.msra.mxu0 %v1621
      %1667 = vmatmul.bf16.gmra.mxu0 %v1637
      %v1668 = vpop.f32.mrf.mxu0
      %v1669 = vadd.f32 0.0, %v1668
      %v1670 = vpop.f32.mrf.mxu0
      %v1671 = vadd.f32 0.0, %v1670
      %1672 = vdwg.mxu0
      %v1673 = vmax.f32 %v1655, 0.0
      %v1674 = vmax.f32 %v1669, 0.0
      %v1675 = vmax.f32 %v1657, 0.0
      %v1676 = vmax.f32 %v1671, 0.0
      %1681 = vrot.lane.b32.xlu0 %v1673, 17
      %v1682 = vpop.permute.xlu0 %1681
      %1683 = vrot.lane.b32.xlu0 %v1674, 17
      %v1684 = vpop.permute.xlu0 %1683
      %1685 = vrot.lane.b32.xlu0 %v1675, 17
      %v1686 = vpop.permute.xlu0 %1685
      %1687 = vrot.lane.b32.xlu0 %v1676, 17
      %v1688 = vpop.permute.xlu0 %1687
      %v1689 = vsel %vm316, %v1682, %v1684
      %v1690 = vsel %vm316, %v1686, %v1688
      %vm1697 = vcmask 1047688
      %1698 = vst.msk [vmem:[#allocation6] sm:$0xff] %vm1697, %v1682
      %1699 = vst [vmem:[#allocation6 + $0x8] sm:$0xff] %v1689
      %1700 = vst.msk [vmem:[#allocation6 + $0x10] sm:$0xff] %vm316, %v1684
      %1701 = vst.msk [vmem:[#allocation6 + $0x18] sm:$0xff] %vm1697, %v1686
      %1702 = vst [vmem:[#allocation6 + $0x20] sm:$0xff] %v1690
      %1703 = vst.msk [vmem:[#allocation6 + $0x28] sm:$0xff] %vm316, %v1688
      %v1704 = vld [vmem:[#allocation6] sm:$0xff]
      %v1705 = vld [vmem:[#allocation6 + $0x8] sm:$0xff]
      %v1706 = vld [vmem:[#allocation6 + $0x10] sm:$0xff]
      %v1707 = vld [vmem:[#allocation6 + $0x18] sm:$0xff]
      %v1708 = vld [vmem:[#allocation6 + $0x20] sm:$0xff]
      %v1709 = vld [vmem:[#allocation6 + $0x28] sm:$0xff]
      %v1710 = vsel %vm864, %v1704, 0.0
      %v1711 = vsel %vm865, %v1705, 0.0
      %v1712 = vsel %vm864, %v1707, 0.0
      %v1713 = vsel %vm865, %v1708, 0.0
      %1714 = vst [vmem:[#allocation8] sm:$0xff] %v1710
      %1715 = vst [vmem:[#allocation8 + $0x8] sm:$0xff] %v1711
      %1716 = vst [vmem:[#allocation8 + $0x10] sm:$0xff] %v1712
      %1717 = vst [vmem:[#allocation8 + $0x18] sm:$0xff] %v1713
      %1724 = vrot.lane.b32.xlu0 %v1704, 127
      %v1725 = vpop.permute.xlu0 %1724
      %1726 = vrot.lane.b32.xlu0 %v1705, 127
      %v1727 = vpop.permute.xlu0 %1726
      %1728 = vrot.lane.b32.xlu0 %v1706, 127
      %v1729 = vpop.permute.xlu0 %1728
      %1730 = vrot.lane.b32.xlu0 %v1707, 127
      %v1731 = vpop.permute.xlu0 %1730
      %1732 = vrot.lane.b32.xlu0 %v1708, 127
      %v1733 = vpop.permute.xlu0 %1732
      %1734 = vrot.lane.b32.xlu0 %v1709, 127
      %v1735 = vpop.permute.xlu0 %1734
      %v1736 = vsel %vm884, %v1725, %v1727
      %v1737 = vsel %vm884, %v1727, %v1729
      %v1738 = vsel %vm884, %v1731, %v1733
      %v1739 = vsel %vm884, %v1733, %v1735
      %1744 = vst [vmem:[#allocation8 + $0x20] sm:$0xff] %v1736
      %1745 = vst [vmem:[#allocation8 + $0x28] sm:$0xff] %v1737
      %1746 = vst [vmem:[#allocation8 + $0x30] sm:$0xff] %v1738
      %1747 = vst [vmem:[#allocation8 + $0x38] sm:$0xff] %v1739
      %1748 = vrot.lane.b32.xlu0 %v1704, 126
      %v1749 = vpop.permute.xlu0 %1748
      %1750 = vrot.lane.b32.xlu0 %v1705, 126
      %v1751 = vpop.permute.xlu0 %1750
      %1752 = vrot.lane.b32.xlu0 %v1706, 126
      %v1753 = vpop.permute.xlu0 %1752
      %1754 = vrot.lane.b32.xlu0 %v1707, 126
      %v1755 = vpop.permute.xlu0 %1754
      %1756 = vrot.lane.b32.xlu0 %v1708, 126
      %v1757 = vpop.permute.xlu0 %1756
      %1758 = vrot.lane.b32.xlu0 %v1709, 126
      %v1759 = vpop.permute.xlu0 %1758
      %v1760 = vsel %vm902, %v1749, %v1751
      %v1761 = vsel %vm902, %v1751, %v1753
      %v1762 = vsel %vm902, %v1755, %v1757
      %v1763 = vsel %vm902, %v1757, %v1759
      %v1768 = vsel %vm893, %v1760, 0.0
      %v1769 = vsel %vm894, %v1761, 0.0
      %v1770 = vsel %vm893, %v1762, 0.0
      %v1771 = vsel %vm894, %v1763, 0.0
      %1772 = vst [vmem:[#allocation8 + $0x40] sm:$0xff] %v1768
      %1773 = vst [vmem:[#allocation8 + $0x48] sm:$0xff] %v1769
      %1774 = vst [vmem:[#allocation8 + $0x50] sm:$0xff] %v1770
      %1775 = vst [vmem:[#allocation8 + $0x58] sm:$0xff] %v1771
      %1776 = vrot.lane.b32.xlu0 %v1704, 112
      %v1777 = vpop.permute.xlu0 %1776
      %1778 = vrot.lane.b32.xlu0 %v1705, 112
      %v1779 = vpop.permute.xlu0 %1778
      %1780 = vrot.lane.b32.xlu0 %v1706, 112
      %v1781 = vpop.permute.xlu0 %1780
      %1782 = vrot.lane.b32.xlu0 %v1707, 112
      %v1783 = vpop.permute.xlu0 %1782
      %1784 = vrot.lane.b32.xlu0 %v1708, 112
      %v1785 = vpop.permute.xlu0 %1784
      %1786 = vrot.lane.b32.xlu0 %v1709, 112
      %v1787 = vpop.permute.xlu0 %1786
      %v1788 = vsel %vm686, %v1777, %v1779
      %v1789 = vsel %vm686, %v1779, %v1781
      %v1790 = vsel %vm686, %v1783, %v1785
      %v1791 = vsel %vm686, %v1785, %v1787
      %v1796 = vsel %vm864, %v1788, 0.0
      %v1797 = vsel %vm865, %v1789, 0.0
      %v1798 = vsel %vm864, %v1790, 0.0
      %v1799 = vsel %vm865, %v1791, 0.0
      %1800 = vst [vmem:[#allocation8 + $0x60] sm:$0xff] %v1796
      %1801 = vst [vmem:[#allocation8 + $0x68] sm:$0xff] %v1797
      %1802 = vst [vmem:[#allocation8 + $0x70] sm:$0xff] %v1798
      %1803 = vst [vmem:[#allocation8 + $0x78] sm:$0xff] %v1799
      %1804 = vrot.lane.b32.xlu0 %v1704, 111
      %v1805 = vpop.permute.xlu0 %1804
      %1806 = vrot.lane.b32.xlu0 %v1705, 111
      %v1807 = vpop.permute.xlu0 %1806
      %1808 = vrot.lane.b32.xlu0 %v1706, 111
      %v1809 = vpop.permute.xlu0 %1808
      %1810 = vrot.lane.b32.xlu0 %v1707, 111
      %v1811 = vpop.permute.xlu0 %1810
      %1812 = vrot.lane.b32.xlu0 %v1708, 111
      %v1813 = vpop.permute.xlu0 %1812
      %1814 = vrot.lane.b32.xlu0 %v1709, 111
      %v1815 = vpop.permute.xlu0 %1814
      %v1816 = vsel %vm937, %v1805, %v1807
      %v1817 = vsel %vm937, %v1807, %v1809
      %v1818 = vsel %vm937, %v1811, %v1813
      %v1819 = vsel %vm937, %v1813, %v1815
      %1824 = vst [vmem:[#allocation8 + $0x80] sm:$0xff] %v1816
      %1825 = vst [vmem:[#allocation8 + $0x88] sm:$0xff] %v1817
      %1826 = vst [vmem:[#allocation8 + $0x90] sm:$0xff] %v1818
      %1827 = vst [vmem:[#allocation8 + $0x98] sm:$0xff] %v1819
      %1828 = vrot.lane.b32.xlu0 %v1704, 110
      %v1829 = vpop.permute.xlu0 %1828
      %1830 = vrot.lane.b32.xlu0 %v1705, 110
      %v1831 = vpop.permute.xlu0 %1830
      %1832 = vrot.lane.b32.xlu0 %v1706, 110
      %v1833 = vpop.permute.xlu0 %1832
      %1834 = vrot.lane.b32.xlu0 %v1707, 110
      %v1835 = vpop.permute.xlu0 %1834
      %1836 = vrot.lane.b32.xlu0 %v1708, 110
      %v1837 = vpop.permute.xlu0 %1836
      %1838 = vrot.lane.b32.xlu0 %v1709, 110
      %v1839 = vpop.permute.xlu0 %1838
      %v1840 = vsel %vm950, %v1829, %v1831
      %v1841 = vsel %vm950, %v1831, %v1833
      %v1842 = vsel %vm950, %v1835, %v1837
      %v1843 = vsel %vm950, %v1837, %v1839
      %v1848 = vsel %vm893, %v1840, 0.0
      %v1849 = vsel %vm894, %v1841, 0.0
      %v1850 = vsel %vm893, %v1842, 0.0
      %v1851 = vsel %vm894, %v1843, 0.0
      %1852 = vst [vmem:[#allocation8 + $0xa0] sm:$0xff] %v1848
      %1853 = vst [vmem:[#allocation8 + $0xa8] sm:$0xff] %v1849
      %1854 = vst [vmem:[#allocation8 + $0xb0] sm:$0xff] %v1850
      %1855 = vst [vmem:[#allocation8 + $0xb8] sm:$0xff] %v1851
      %1856 = vrot.lane.b32.xlu0 %v1704, 96
      %v1857 = vpop.permute.xlu0 %1856
      %1858 = vrot.lane.b32.xlu0 %v1705, 96
      %v1859 = vpop.permute.xlu0 %1858
      %1860 = vrot.lane.b32.xlu0 %v1706, 96
      %v1861 = vpop.permute.xlu0 %1860
      %1862 = vrot.lane.b32.xlu0 %v1707, 96
      %v1863 = vpop.permute.xlu0 %1862
      %1864 = vrot.lane.b32.xlu0 %v1708, 96
      %v1865 = vpop.permute.xlu0 %1864
      %1866 = vrot.lane.b32.xlu0 %v1709, 96
      %v1867 = vpop.permute.xlu0 %1866
      %v1868 = vsel %vm705, %v1857, %v1859
      %v1869 = vsel %vm705, %v1859, %v1861
      %v1870 = vsel %vm705, %v1863, %v1865
      %v1871 = vsel %vm705, %v1865, %v1867
      %v1876 = vsel %vm864, %v1868, 0.0
      %v1877 = vsel %vm865, %v1869, 0.0
      %v1878 = vsel %vm864, %v1870, 0.0
      %v1879 = vsel %vm865, %v1871, 0.0
      %1880 = vst [vmem:[#allocation8 + $0xc0] sm:$0xff] %v1876
      %1881 = vst [vmem:[#allocation8 + $0xc8] sm:$0xff] %v1877
      %1882 = vst [vmem:[#allocation8 + $0xd0] sm:$0xff] %v1878
      %1883 = vst [vmem:[#allocation8 + $0xd8] sm:$0xff] %v1879
      %1884 = vrot.lane.b32.xlu0 %v1704, 95
      %v1885 = vpop.permute.xlu0 %1884
      %1886 = vrot.lane.b32.xlu0 %v1705, 95
      %v1887 = vpop.permute.xlu0 %1886
      %1888 = vrot.lane.b32.xlu0 %v1706, 95
      %v1889 = vpop.permute.xlu0 %1888
      %1890 = vrot.lane.b32.xlu0 %v1707, 95
      %v1891 = vpop.permute.xlu0 %1890
      %1892 = vrot.lane.b32.xlu0 %v1708, 95
      %v1893 = vpop.permute.xlu0 %1892
      %1894 = vrot.lane.b32.xlu0 %v1709, 95
      %v1895 = vpop.permute.xlu0 %1894
      %v1896 = vsel %vm986, %v1885, %v1887
      %v1897 = vsel %vm986, %v1887, %v1889
      %v1898 = vsel %vm986, %v1891, %v1893
      %v1899 = vsel %vm986, %v1893, %v1895
      %1904 = vst [vmem:[#allocation8 + $0xe0] sm:$0xff] %v1896
      %1905 = vst [vmem:[#allocation8 + $0xe8] sm:$0xff] %v1897
      %1906 = vst [vmem:[#allocation8 + $0xf0] sm:$0xff] %v1898
      %1907 = vst [vmem:[#allocation8 + $0xf8] sm:$0xff] %v1899
      %1908 = vrot.lane.b32.xlu0 %v1704, 94
      %v1909 = vpop.permute.xlu0 %1908
      %1910 = vrot.lane.b32.xlu0 %v1705, 94
      %v1911 = vpop.permute.xlu0 %1910
      %1912 = vrot.lane.b32.xlu0 %v1706, 94
      %v1913 = vpop.permute.xlu0 %1912
      %1914 = vrot.lane.b32.xlu0 %v1707, 94
      %v1915 = vpop.permute.xlu0 %1914
      %1916 = vrot.lane.b32.xlu0 %v1708, 94
      %v1917 = vpop.permute.xlu0 %1916
      %1918 = vrot.lane.b32.xlu0 %v1709, 94
      %v1919 = vpop.permute.xlu0 %1918
      %v1920 = vsel %vm999, %v1909, %v1911
      %v1921 = vsel %vm999, %v1911, %v1913
      %v1922 = vsel %vm999, %v1915, %v1917
      %v1923 = vsel %vm999, %v1917, %v1919
      %v1928 = vsel %vm893, %v1920, 0.0
      %v1929 = vsel %vm894, %v1921, 0.0
      %v1930 = vsel %vm893, %v1922, 0.0
      %v1931 = vsel %vm894, %v1923, 0.0
      %1932 = vst [vmem:[#allocation8 + $0x100] sm:$0xff] %v1928
      %1933 = vst [vmem:[#allocation8 + $0x108] sm:$0xff] %v1929
      %1934 = vst [vmem:[#allocation8 + $0x110] sm:$0xff] %v1930
      %1935 = vst [vmem:[#allocation8 + $0x118] sm:$0xff] %v1931
      %v1936 = vld [vmem:[%s7] sm:$0xf]
      %v1937 = vld [vmem:[#allocation8] sm:$0xff]
      %v1938 = vld [vmem:[#allocation8 + $0x8] sm:$0xff]
      %v1939 = vld [vmem:[#allocation8 + $0x10] sm:$0xff]
      %v1940 = vld [vmem:[#allocation8 + $0x18] sm:$0xff]
      %v1941 = vld [vmem:[#allocation8 + $0x20] sm:$0xff]
      %v1942 = vld [vmem:[#allocation8 + $0x28] sm:$0xff]
      %v1943 = vld [vmem:[#allocation8 + $0x30] sm:$0xff]
      %v1944 = vld [vmem:[#allocation8 + $0x38] sm:$0xff]
      %v1945 = vld [vmem:[#allocation8 + $0x40] sm:$0xff]
      %v1946 = vld [vmem:[#allocation8 + $0x48] sm:$0xff]
      %v1947 = vld [vmem:[#allocation8 + $0x50] sm:$0xff]
      %v1948 = vld [vmem:[#allocation8 + $0x58] sm:$0xff]
      %v1949 = vld [vmem:[#allocation8 + $0x60] sm:$0xff]
      %v1950 = vld [vmem:[#allocation8 + $0x68] sm:$0xff]
      %v1951 = vld [vmem:[#allocation8 + $0x70] sm:$0xff]
      %v1952 = vld [vmem:[#allocation8 + $0x78] sm:$0xff]
      %v1953 = vld [vmem:[#allocation8 + $0x80] sm:$0xff]
      %v1954 = vld [vmem:[#allocation8 + $0x88] sm:$0xff]
      %v1955 = vld [vmem:[#allocation8 + $0x90] sm:$0xff]
      %v1956 = vld [vmem:[#allocation8 + $0x98] sm:$0xff]
      %v1957 = vld [vmem:[#allocation8 + $0xa0] sm:$0xff]
      %v1958 = vld [vmem:[#allocation8 + $0xa8] sm:$0xff]
      %v1959 = vld [vmem:[#allocation8 + $0xb0] sm:$0xff]
      %v1960 = vld [vmem:[#allocation8 + $0xb8] sm:$0xff]
      %v1961 = vld [vmem:[#allocation8 + $0xc0] sm:$0xff]
      %v1962 = vld [vmem:[#allocation8 + $0xc8] sm:$0xff]
      %v1963 = vld [vmem:[#allocation8 + $0xd0] sm:$0xff]
      %v1964 = vld [vmem:[#allocation8 + $0xd8] sm:$0xff]
      %v1965 = vld [vmem:[#allocation8 + $0xe0] sm:$0xff]
      %v1966 = vld [vmem:[#allocation8 + $0xe8] sm:$0xff]
      %v1967 = vld [vmem:[#allocation8 + $0xf0] sm:$0xff]
      %v1968 = vld [vmem:[#allocation8 + $0xf8] sm:$0xff]
      %v1969 = vld [vmem:[#allocation8 + $0x100] sm:$0xff]
      %v1970 = vld [vmem:[#allocation8 + $0x108] sm:$0xff]
      %v1971 = vld [vmem:[#allocation8 + $0x110] sm:$0xff]
      %v1972 = vld [vmem:[#allocation8 + $0x118] sm:$0xff]
      %v1973 = vpack.c.bf16 %v1939, %v1937
      %v1974 = vpack.c.bf16 %v1940, %v1938
      %v1975 = vpack.c.bf16 %v1943, %v1941
      %v1976 = vpack.c.bf16 %v1944, %v1942
      %v1977 = vpack.c.bf16 %v1947, %v1945
      %v1978 = vpack.c.bf16 %v1948, %v1946
      %v1979 = vpack.c.bf16 %v1951, %v1949
      %v1980 = vpack.c.bf16 %v1952, %v1950
      %v1981 = vpack.c.bf16 %v1955, %v1953
      %v1982 = vpack.c.bf16 %v1956, %v1954
      %v1983 = vpack.c.bf16 %v1959, %v1957
      %v1984 = vpack.c.bf16 %v1960, %v1958
      %v1985 = vpack.c.bf16 %v1963, %v1961
      %v1986 = vpack.c.bf16 %v1964, %v1962
      %v1987 = vpack.c.bf16 %v1967, %v1965
      %v1988 = vpack.c.bf16 %v1968, %v1966
      %v1989 = vpack.c.bf16 %v1971, %v1969
      %v1990 = vpack.c.bf16 %v1972, %v1970
      %1992 = vst [vmem:[#allocation1] ss:$4 sm:$0xff] %v1936
      %v1993 = vld.sshfl [vmem:[#allocation1] sm:$0xff pattern:$0x73625140]
      %v1994 = vld.sshfl [vmem:[#allocation1 + $0x8] sm:$0xff pattern:$0x73625140]
      %v1996 = vsel %vm817, %v1994, 0
      %1998 = vmatpush.bf16.msra.mxu0 %v1987
      %1999 = vmatpush.bf16.msra.mxu0 %v1985
      %2000 = vmatpush.bf16.msra.mxu0 %v1983
      %2001 = vmatpush.bf16.msra.mxu0 %v1981
      %2002 = vmatpush.bf16.msra.mxu0 %v1979
      %2003 = vmatpush.bf16.msra.mxu0 %v1977
      %2004 = vmatpush.bf16.msra.mxu0 %v1975
      %2005 = vmatpush.bf16.msra.mxu0 %v1973
      %2006 = vmatmul.bf16.gmra.mxu0 %v1993
      %v2007 = vpop.f32.mrf.mxu0
      %v2008 = vadd.f32 0.0, %v2007
      %v2009 = vpop.f32.mrf.mxu0
      %2010 = vdwg.mxu0
      %2011 = vmatpush.bf16.msra.mxu0 0
      %2012 = vmatpush.bf16.msra.mxu0 0
      %2013 = vmatpush.bf16.msra.mxu0 0
      %2014 = vmatpush.bf16.msra.mxu0 0
      %2015 = vmatpush.bf16.msra.mxu0 0
      %2016 = vmatpush.bf16.msra.mxu0 0
      %2017 = vmatpush.bf16.msra.mxu0 0
      %2018 = vmatpush.bf16.msra.mxu0 %v1989
      %2019 = vmatmul.bf16.gmra.mxu0 %v1996
      %v2020 = vpop.f32.mrf.mxu0
      %v2021 = vadd.f32 %v2008, %v2020
      %v2022 = vpop.f32.mrf.mxu0
      %2023 = vdwg.mxu0
      %2024 = vmatpush.bf16.msra.mxu0 %v1988
      %2025 = vmatpush.bf16.msra.mxu0 %v1986
      %2026 = vmatpush.bf16.msra.mxu0 %v1984
      %2027 = vmatpush.bf16.msra.mxu0 %v1982
      %2028 = vmatpush.bf16.msra.mxu0 %v1980
      %2029 = vmatpush.bf16.msra.mxu0 %v1978
      %2030 = vmatpush.bf16.msra.mxu0 %v1976
      %2031 = vmatpush.bf16.msra.mxu0 %v1974
      %2032 = vmatmul.bf16.gmra.mxu0 %v1993
      %v2033 = vpop.f32.mrf.mxu0
      %v2034 = vadd.f32 0.0, %v2033
      %v2035 = vpop.f32.mrf.mxu0
      %2036 = vdwg.mxu0
      %2037 = vmatpush.bf16.msra.mxu0 0
      %2038 = vmatpush.bf16.msra.mxu0 0
      %2039 = vmatpush.bf16.msra.mxu0 0
      %2040 = vmatpush.bf16.msra.mxu0 0
      %2041 = vmatpush.bf16.msra.mxu0 0
      %2042 = vmatpush.bf16.msra.mxu0 0
      %2043 = vmatpush.bf16.msra.mxu0 0
      %2044 = vmatpush.bf16.msra.mxu0 %v1990
      %2045 = vmatmul.bf16.gmra.mxu0 %v1996
      %v2046 = vpop.f32.mrf.mxu0
      %v2047 = vadd.f32 %v2034, %v2046
      %v2048 = vpop.f32.mrf.mxu0
      %2049 = vdwg.mxu0
      %v2052 = vrot.slane %v2047, 4
      %v2053 = vsel %vm647, %v2021, %v2052
      %2055 = vst [vmem:[%s305] sm:$0xff] %v2053
      %p2056 = scmp.lt.s32.totalorder %s19, 1
      %s2057 = scalar_select %p2056, %s19, 1
      %s2058 = smul.addr %s2057, 2
      %s2059 = smul.addr %s2058, 4
      %s2060 = scalar_lea.vmem %s8, %s2059
      // Predicated region
      $region53: #{cat_htiht_forward.1} parent=51 // pred_check
        %p2061 = pneg %p210
      $region54: #{cat_htiht_forward.1} parent=51 // pred_check_branch
        %2063 = sbr.rel (%p2061) target = $region56
      $region55: #{cat_htiht_forward.1} parent=51 // pred_region
        _
      $region56: #{cat_htiht_forward.1} parent=51 // pred_fallthru
        _
    $region52: #{cat_htiht_forward.1} parent=5 // pred_fallthru
      _
    %p2064 = scmp.le.s32.totalorder 2, %s14
    // Predicated region
    $region57: #{cat_htiht_forward.1} parent=5 // pred_check
      %p2065 = pneg %p2064
    $region58: #{cat_htiht_forward.1} parent=5 // pred_check_branch
      %2067 = sbr.rel (%p2065) target = $region60
    $region59: #{cat_htiht_forward.1} parent=5 // pred_region
      %s2068 = ssub.s32 %s14, 2
      // Predicated region
      $region61: #{cat_htiht_forward.1} parent=59 // pred_check
        %p2069 = pneg %p216
      $region62: #{cat_htiht_forward.1} parent=59 // pred_check_branch
        %2071 = sbr.rel (%p2069) target = $region64
      $region63: #{cat_htiht_forward.1} parent=59 // pred_region
        %p2072 = scmp.lt.s32.totalorder %s20, 1
        %s2073 = scalar_select %p2072, %s20, 1
        %s2074 = smul.addr %s2073, 2
        %s2075 = smul.addr %s2074, 4
        %s2076 = scalar_lea.vmem %s8, %s2075
      $region64: #{cat_htiht_forward.1} parent=59 // pred_fallthru
        _
    $region60: #{cat_htiht_forward.1} parent=5 // pred_fallthru
      _
  $region6: #{cat_htiht_forward.1} parent=0 // loop_footer
    %s18 = sadd.s32 1, %s14
  $region7: #{cat_htiht_forward.1} parent=0 // loop_footer_branch
    %13 = sbr.rel target = $region3
  $region8: #{cat_htiht_forward.1} parent=0 // loop_exit
    _

</llo_original>
